<compile_context>
chip_gen: v7x
topology: tpu7x:2x2x1
jax: 0.10.0
libtpu: 0.0.40
codegen_flags: <defaults>
</compile_context>

<pallas_src>
import functools

import jax
import jax.numpy as jnp
from jax.experimental import pallas as pl
from jax.experimental.pallas import tpu as pltpu

LATENT = 64
FEAT = LATENT + 3           # 67
H1, H2, H3, OUT = 128, 64, 32, 1
MAX_TILE_POINTS = 8192      # per-tile grid points: amortizes the ~0.35us/step
                            # overhead, fits every chip's VMEM with the hoisted
                            # (H1, P) layer-1 slab (v5e-safe per perf review).


def _sdf_kernel(R, TR, h1lat_ref, w1x_ref, w1y_ref, h1pre_ref,
                w2_ref, b2_ref, w3_ref, b3_ref, w4_ref, b4_ref, out_ref):
    # grid = (batch b, x index i, y-block jb); one tile = TR rows of y * R of z.
    i = pl.program_id(1)
    jb = pl.program_id(2)
    step = 2.0 / (R - 1)                                   # linspace(-1, 1, R)

    # x and the tile's y-base are constant over the tile -> fold them (plus the
    # hoisted latent contribution, which already carries b1) into one (H1, 1)
    # layer-1 bias column.
    xv = -1.0 + step * i.astype(jnp.float32)               # scalar
    ybase = -1.0 + step * (jb * TR).astype(jnp.float32)    # scalar
    bias1 = h1lat_ref[...] + xv * w1x_ref[...] + ybase * w1y_ref[...]   # (H1,1)

    # Layer 1: the per-point (y_local, z) part was hoisted to the wrapper as
    # h1pre (H1, P); in-kernel layer 1 is add + ReLU only (no MXU, no iota).
    # bf16 cast happens only as the layer-2 MXU operand (single materialization).
    h = jnp.maximum(h1pre_ref[...] + bias1, 0.0).astype(jnp.bfloat16)   # (H1,P)

    # Layers 2/3: bf16 operands, f32 accumulate; bias+ReLU(+cast) fused.
    h = jnp.maximum(
        jnp.dot(w2_ref[...], h, preferred_element_type=jnp.float32) + b2_ref[...],
        0.0).astype(jnp.bfloat16)                                       # (H2,P)
    h = jnp.maximum(
        jnp.dot(w3_ref[...], h, preferred_element_type=jnp.float32) + b3_ref[...],
        0.0)                                                            # (H3,P) f32

    # Layer 4 (single output row): keep it off the MXU -> rank-1 VPU multiply
    # plus a sublane (XLU) reduce, all in f32.
    o = jnp.sum(w4_ref[...] * h, axis=0, keepdims=True) + b4_ref[...]   # (1,P)
    out_ref[...] = jax.nn.sigmoid(o)


def _pick_tile_rows(R):
    tr = R
    while tr > 1 and tr * R > MAX_TILE_POINTS:
        tr //= 2
    return tr


def generator_sdf_forward(x, params, *, res=128, tr=None):
    """x: (B, 64, 1, 1) NCHW latent code.  Returns sdf of shape (B, res, res, res)."""
    B = x.shape[0]
    assert x.shape[1] == LATENT
    R = res
    assert R >= 2
    TR = _pick_tile_rows(R) if tr is None else tr
    assert R % TR == 0 and (TR * R) % 128 == 0, (R, TR)
    P = TR * R
    N = R * R * R
    step = 2.0 / (R - 1)

    w1, b1 = params["w1"], params["b1"]                 # (H1, 67), (H1,)

    # --- layer-1 hoists (all grid-constant work moves out of the kernel) ---
    # latent part (per batch element), incl. b1:
    lat = x.reshape(B, LATENT).astype(jnp.float32)
    h1lat = (jnp.dot(lat, w1[:, :LATENT].T,
                     precision=jax.lax.Precision.HIGHEST) + b1).reshape(B, H1, 1)
    w1x = w1[:, LATENT:LATENT + 1].astype(jnp.float32)          # (H1, 1)
    w1y = w1[:, LATENT + 1:LATENT + 2].astype(jnp.float32)      # (H1, 1)
    w1z = w1[:, LATENT + 2:LATENT + 3].astype(jnp.float32)      # (H1, 1)
    # per-point (y_local, z) part: identical for every tile -> one (H1, P) slab.
    p_idx = jnp.arange(P, dtype=jnp.int32)
    ylocal = (step * (p_idx // R)).astype(jnp.float32)          # y offset in tile
    zrow = (-1.0 + step * (p_idx % R)).astype(jnp.float32)      # z coordinate
    h1pre = w1y * ylocal[None, :] + w1z * zrow[None, :]         # (H1, P) f32

    w2 = params["w2"].astype(jnp.bfloat16)
    w3 = params["w3"].astype(jnp.bfloat16)
    w4col = params["w4"].reshape(OUT, H3).T.astype(jnp.float32)  # (H3, 1)
    b2 = params["b2"].reshape(H2, 1).astype(jnp.float32)
    b3 = params["b3"].reshape(H3, 1).astype(jnp.float32)
    b4 = params["b4"].reshape(1, 1).astype(jnp.float32)

    kernel = functools.partial(_sdf_kernel, R, TR)

    def full(shape):   # small / grid-constant array, fetched once
        return pl.BlockSpec(shape, lambda b, i, jb: (0,) * len(shape))

    # Only raise the scoped-VMEM limit when the tile actually needs it (keeps
    # small shapes on the default compile path; 48 MiB stays under v7x's 64 MiB
    # physical with headroom, well under v5e/v6e's 128 MiB).
    cp_kwargs = dict(dimension_semantics=("parallel", "parallel", "parallel"))
    vmem_est = (2 * 4 * H1 * P                 # hoisted slab (double-buffered)
                + 4 * P * (H1 + H2 + H3 + 2)   # f32 activation slabs
                + 2 * P * (H1 + H2))           # bf16 MXU operand copies
    if vmem_est > 12 * (1 << 20):
        cp_kwargs["vmem_limit_bytes"] = 48 * (1 << 20)

    cost = pl.CostEstimate(
        flops=2 * B * N * (H1 * H2 + H2 * H3 + H3) + 4 * B * N * H1,
        transcendentals=B * N,                      # sigmoid
        bytes_accessed=4 * B * N + 4 * H1 * P + 4 * B * H1,
    )

    out = pl.pallas_call(
        kernel,
        out_shape=jax.ShapeDtypeStruct((B, 1, N), jnp.float32),
        grid=(B, R, R // TR),
        in_specs=[
            pl.BlockSpec((None, H1, 1), lambda b, i, jb: (b, 0, 0)),  # h1lat col
            full((H1, 1)),          # w1 x-column
            full((H1, 1)),          # w1 y-column (for the scalar y_base term)
            full((H1, P)),          # hoisted layer-1 (y_local, z) slab
            full((H2, H1)), full((H2, 1)),
            full((H3, H2)), full((H3, 1)),
            full((H3, 1)), full((1, 1)),
        ],
        out_specs=pl.BlockSpec((None, 1, P),
                               lambda b, i, jb: (b, 0, i * (R // TR) + jb)),
        compiler_params=pltpu.CompilerParams(**cp_kwargs),
        cost_estimate=cost,
    )(h1lat, w1x, w1y, h1pre, w2, b2, w3, b3, w4col, b4)

    return out.reshape(B, R, R, R)


def init_params(key):
    """Deterministic PyTorch-default-style init for MLP([67,128,64,32,1])."""
    def linear(k, fan_in, fan_out):
        kw, kb = jax.random.split(k)
        bound = 1.0 / (fan_in ** 0.5)
        w = jax.random.uniform(kw, (fan_out, fan_in), jnp.float32, -bound, bound)
        b = jax.random.uniform(kb, (fan_out,), jnp.float32, -bound, bound)
        return w, b
    k1, k2, k3, k4 = jax.random.split(key, 4)
    w1, b1 = linear(k1, FEAT, H1)
    w2, b2 = linear(k2, H1, H2)
    w3, b3 = linear(k3, H2, H3)
    w4, b4 = linear(k4, H3, OUT)
    return dict(w1=w1, b1=b1, w2=w2, b2=b2, w3=w3, b3=b3, w4=w4, b4=b4)


def reference(x, params, res):
    """Pure-JAX re-implementation of the PyTorch forward (for verification)."""
    B, R = x.shape[0], res
    lines = jnp.linspace(-1.0, 1.0, R, dtype=jnp.float32)
    a, b_, c = jnp.meshgrid(lines, lines, lines, indexing="ij")
    pts = jnp.stack([a, b_, c], axis=0).reshape(3, -1)                   # (3, N)
    lat = x.reshape(B, LATENT, 1)
    feat = jnp.concatenate(
        [jnp.broadcast_to(lat, (B, LATENT, R ** 3)),
         jnp.broadcast_to(pts[None], (B, 3, R ** 3))], axis=1)           # (B, 67, N)
    h = jnp.swapaxes(feat, 1, 2)                                          # (B, N, 67)
    h = jax.nn.relu(h @ params["w1"].T + params["b1"])
    h = jax.nn.relu(h @ params["w2"].T + params["b2"])
    h = jax.nn.relu(h @ params["w3"].T + params["b3"])
    h = jax.nn.sigmoid(h @ params["w4"].T + params["b4"])
    return h[..., 0].reshape(B, R, R, R)


if __name__ == "__main__":
    key = jax.random.PRNGKey(0)
    kx, kp = jax.random.split(key)

    B = 2
    # The PyTorch module hard-codes a 128^3 grid; the wrapper defaults to 128.
    # The demo uses a reduced 32^3 grid to keep the run small and fast.
    RES = 32

    x = jax.random.normal(kx, (B, LATENT, 1, 1), jnp.float32)  # NCHW latent
    params = init_params(kp)

    sdf = generator_sdf_forward(x, params, res=RES)
    sdf = jax.block_until_ready(sdf)
    assert sdf.shape == (B, RES, RES, RES)

    ref = reference(x, params, RES)
    err = float(jnp.max(jnp.abs(sdf - ref)))
    # Layers 2/3 use bf16 MXU operands (f32 accumulate); the post-sigmoid error
    # vs. the all-f32 reference is ~1e-3, so validate at a slightly relaxed
    # tolerance.  All layer-1 / layer-4 math remains f32.
    assert jnp.allclose(sdf, ref, atol=2e-3, rtol=2e-3), err

    print("KERNEL_OK")
</pallas_src>

<mosaic_0001>
module attributes {stable_mosaic.version = 11 : i64} {
  func.func @_sdf_kernel(%arg0: i32, %arg1: i32, %arg2: i32, %arg3: memref<1x128x1xf32, #tpu.memory_space<vmem>>, %arg4: memref<128x1xf32, #tpu.memory_space<vmem>>, %arg5: memref<128x1xf32, #tpu.memory_space<vmem>>, %arg6: memref<128x1024xf32, #tpu.memory_space<vmem>>, %arg7: memref<64x128xbf16, #tpu.memory_space<vmem>>, %arg8: memref<64x1xf32, #tpu.memory_space<vmem>>, %arg9: memref<32x64xbf16, #tpu.memory_space<vmem>>, %arg10: memref<32x1xf32, #tpu.memory_space<vmem>>, %arg11: memref<32x1xf32, #tpu.memory_space<vmem>>, %arg12: memref<1x1xf32, #tpu.memory_space<vmem>>, %arg13: memref<1x1x1024xf32, #tpu.memory_space<vmem>>) attributes {dimension_semantics = [#tpu.dimension_semantics<parallel>, #tpu.dimension_semantics<parallel>, #tpu.dimension_semantics<parallel>], iteration_bounds = array<i64: 2, 32, 1>, scalar_prefetch = 0 : i64, scratch_operands = 0 : i64, tpu.core_type = #tpu.core_type<tc>, window_params = [{transform_indices = @transform_0, window_bounds = array<i64: 1, 128, 1>}, {pipeline_mode = #tpu.pipeline_mode<synchronous>, transform_indices = @transform_1, window_bounds = array<i64: 128, 1>}, {pipeline_mode = #tpu.pipeline_mode<synchronous>, transform_indices = @transform_2, window_bounds = array<i64: 128, 1>}, {pipeline_mode = #tpu.pipeline_mode<synchronous>, transform_indices = @transform_3, window_bounds = array<i64: 128, 1024>}, {pipeline_mode = #tpu.pipeline_mode<synchronous>, transform_indices = @transform_4, window_bounds = array<i64: 64, 128>}, {pipeline_mode = #tpu.pipeline_mode<synchronous>, transform_indices = @transform_5, window_bounds = array<i64: 64, 1>}, {pipeline_mode = #tpu.pipeline_mode<synchronous>, transform_indices = @transform_6, window_bounds = array<i64: 32, 64>}, {pipeline_mode = #tpu.pipeline_mode<synchronous>, transform_indices = @transform_7, window_bounds = array<i64: 32, 1>}, {pipeline_mode = #tpu.pipeline_mode<synchronous>, transform_indices = @transform_8, window_bounds = array<i64: 32, 1>}, {pipeline_mode = #tpu.pipeline_mode<synchronous>, transform_indices = @transform_9, window_bounds = array<i64: 1, 1>}, {transform_indices = @transform_10, window_bounds = array<i64: 1, 1, 1024>}]} {
    %0 = arith.sitofp %arg1 : i32 to f32
    %cst = arith.constant 0.0645161271 : f32
    %1 = arith.mulf %cst, %0 : f32
    %cst_0 = arith.constant -1.000000e+00 : f32
    %2 = arith.addf %cst_0, %1 : f32
    %c32_i32 = arith.constant 32 : i32
    %3 = arith.muli %arg2, %c32_i32 : i32
    %4 = arith.sitofp %3 : i32 to f32
    %cst_1 = arith.constant 0.0645161271 : f32
    %5 = arith.mulf %cst_1, %4 : f32
    %cst_2 = arith.constant -1.000000e+00 : f32
    %6 = arith.addf %cst_2, %5 : f32
    %c0 = arith.constant 0 : index
    %c0_3 = arith.constant 0 : index
    %c0_4 = arith.constant 0 : index
    %7 = vector.load %arg3[%c0, %c0_3, %c0_4] : memref<1x128x1xf32, #tpu.memory_space<vmem>>, vector<1x128x1xf32>
    %8 = vector.shape_cast %7 : vector<1x128x1xf32> to vector<128x1xf32>
    %c0_5 = arith.constant 0 : index
    %c0_6 = arith.constant 0 : index
    %9 = vector.load %arg4[%c0_5, %c0_6] : memref<128x1xf32, #tpu.memory_space<vmem>>, vector<128x1xf32>
    %10 = vector.broadcast %2 : f32 to vector<128x1xf32>
    %11 = arith.mulf %10, %9 : vector<128x1xf32>
    %12 = arith.addf %8, %11 : vector<128x1xf32>
    %c0_7 = arith.constant 0 : index
    %c0_8 = arith.constant 0 : index
    %13 = vector.load %arg5[%c0_7, %c0_8] : memref<128x1xf32, #tpu.memory_space<vmem>>, vector<128x1xf32>
    %14 = vector.broadcast %6 : f32 to vector<128x1xf32>
    %15 = arith.mulf %14, %13 : vector<128x1xf32>
    %16 = arith.addf %12, %15 : vector<128x1xf32>
    %c0_9 = arith.constant 0 : index
    %c0_10 = arith.constant 0 : index
    %17 = vector.load %arg6[%c0_9, %c0_10] : memref<128x1024xf32, #tpu.memory_space<vmem>>, vector<128x1024xf32>
    %18 = vector.broadcast %16 : vector<128x1xf32> to vector<128x1024xf32>
    %19 = arith.addf %17, %18 : vector<128x1024xf32>
    %cst_11 = arith.constant 0.000000e+00 : f32
    %20 = vector.broadcast %cst_11 : f32 to vector<128x1024xf32>
    %21 = arith.maximumf %19, %20 : vector<128x1024xf32>
    %22 = arith.truncf %21 : vector<128x1024xf32> to vector<128x1024xbf16>
    %c0_12 = arith.constant 0 : index
    %c0_13 = arith.constant 0 : index
    %23 = vector.load %arg7[%c0_12, %c0_13] : memref<64x128xbf16, #tpu.memory_space<vmem>>, vector<64x128xbf16>
    %cst_14 = arith.constant dense<0.000000e+00> : vector<64x1024xf32>
    %24 = tpu.matmul %23, %22, %cst_14 {dimension_numbers = #tpu.dot_dimension_numbers<[1], [0], [0], [1], [0, 0, 1, 1], [], []>} : vector<64x128xbf16>, vector<128x1024xbf16>, vector<64x1024xf32> -> vector<64x1024xf32>
    %c0_15 = arith.constant 0 : index
    %c0_16 = arith.constant 0 : index
    %25 = vector.load %arg8[%c0_15, %c0_16] : memref<64x1xf32, #tpu.memory_space<vmem>>, vector<64x1xf32>
    %26 = vector.broadcast %25 : vector<64x1xf32> to vector<64x1024xf32>
    %27 = arith.addf %24, %26 : vector<64x1024xf32>
    %cst_17 = arith.constant 0.000000e+00 : f32
    %28 = vector.broadcast %cst_17 : f32 to vector<64x1024xf32>
    %29 = arith.maximumf %27, %28 : vector<64x1024xf32>
    %30 = arith.truncf %29 : vector<64x1024xf32> to vector<64x1024xbf16>
    %c0_18 = arith.constant 0 : index
    %c0_19 = arith.constant 0 : index
    %31 = vector.load %arg9[%c0_18, %c0_19] : memref<32x64xbf16, #tpu.memory_space<vmem>>, vector<32x64xbf16>
    %cst_20 = arith.constant dense<0.000000e+00> : vector<32x1024xf32>
    %32 = tpu.matmul %31, %30, %cst_20 {dimension_numbers = #tpu.dot_dimension_numbers<[1], [0], [0], [1], [0, 0, 1, 1], [], []>} : vector<32x64xbf16>, vector<64x1024xbf16>, vector<32x1024xf32> -> vector<32x1024xf32>
    %c0_21 = arith.constant 0 : index
    %c0_22 = arith.constant 0 : index
    %33 = vector.load %arg10[%c0_21, %c0_22] : memref<32x1xf32, #tpu.memory_space<vmem>>, vector<32x1xf32>
    %34 = vector.broadcast %33 : vector<32x1xf32> to vector<32x1024xf32>
    %35 = arith.addf %32, %34 : vector<32x1024xf32>
    %cst_23 = arith.constant 0.000000e+00 : f32
    %36 = vector.broadcast %cst_23 : f32 to vector<32x1024xf32>
    %37 = arith.maximumf %35, %36 : vector<32x1024xf32>
    %c0_24 = arith.constant 0 : index
    %c0_25 = arith.constant 0 : index
    %38 = vector.load %arg11[%c0_24, %c0_25] : memref<32x1xf32, #tpu.memory_space<vmem>>, vector<32x1xf32>
    %39 = vector.broadcast %38 : vector<32x1xf32> to vector<32x1024xf32>
    %40 = arith.mulf %39, %37 : vector<32x1024xf32>
    %cst_26 = arith.constant dense<0.000000e+00> : vector<1024xf32>
    %41 = vector.multi_reduction <add>, %40, %cst_26 [0] : vector<32x1024xf32> to vector<1024xf32>
    %42 = vector.shape_cast %41 : vector<1024xf32> to vector<1x1024xf32>
    %c0_27 = arith.constant 0 : index
    %c0_28 = arith.constant 0 : index
    %43 = vector.load %arg12[%c0_27, %c0_28] : memref<1x1xf32, #tpu.memory_space<vmem>>, vector<1x1xf32>
    %44 = vector.broadcast %43 : vector<1x1xf32> to vector<1x1024xf32>
    %45 = arith.addf %42, %44 : vector<1x1024xf32>
    %46 = arith.negf %45 : vector<1x1024xf32>
    %47 = math.exp %46 : vector<1x1024xf32>
    %cst_29 = arith.constant 1.000000e+00 : f32
    %48 = vector.broadcast %cst_29 : f32 to vector<1x1024xf32>
    %49 = arith.addf %48, %47 : vector<1x1024xf32>
    %50 = arith.divf %48, %49 : vector<1x1024xf32>
    %c0_30 = arith.constant 0 : index
    %c0_31 = arith.constant 0 : index
    %c0_32 = arith.constant 0 : index
    %51 = vector.load %arg13[%c0_30, %c0_31, %c0_32] : memref<1x1x1024xf32, #tpu.memory_space<vmem>>, vector<1x1x1024xf32>
    %52 = vector.shape_cast %51 : vector<1x1x1024xf32> to vector<1x1024xf32>
    %53 = vector.shape_cast %50 : vector<1x1024xf32> to vector<1x1x1024xf32>
    tpu.vector_store %arg13[%c0_30, %c0_31, %c0_32], %53 {strides = array<i32>} : memref<1x1x1024xf32, #tpu.memory_space<vmem>>, vector<1x1x1024xf32>,
    return
  }
  func.func @transform_0(%arg0: i32, %arg1: i32, %arg2: i32) -> (i32, i32, i32) {
    %c0_i32 = arith.constant 0 : i32
    %c0_i32_0 = arith.constant 0 : i32
    %c0_i32_1 = arith.constant 0 : i32
    return %arg0, %c0_i32, %c0_i32_0 : i32, i32, i32
  }
  func.func @transform_1(%arg0: i32, %arg1: i32, %arg2: i32) -> (i32, i32) {
    %c0_i32 = arith.constant 0 : i32
    %c0_i32_0 = arith.constant 0 : i32
    %c0_i32_1 = arith.constant 0 : i32
    return %c0_i32, %c0_i32_0 : i32, i32
  }
  func.func @transform_2(%arg0: i32, %arg1: i32, %arg2: i32) -> (i32, i32) {
    %c0_i32 = arith.constant 0 : i32
    %c0_i32_0 = arith.constant 0 : i32
    %c0_i32_1 = arith.constant 0 : i32
    return %c0_i32, %c0_i32_0 : i32, i32
  }
  func.func @transform_3(%arg0: i32, %arg1: i32, %arg2: i32) -> (i32, i32) {
    %c0_i32 = arith.constant 0 : i32
    %c0_i32_0 = arith.constant 0 : i32
    %c0_i32_1 = arith.constant 0 : i32
    return %c0_i32, %c0_i32_0 : i32, i32
  }
  func.func @transform_4(%arg0: i32, %arg1: i32, %arg2: i32) -> (i32, i32) {
    %c0_i32 = arith.constant 0 : i32
    %c0_i32_0 = arith.constant 0 : i32
    %c0_i32_1 = arith.constant 0 : i32
    return %c0_i32, %c0_i32_0 : i32, i32
  }
  func.func @transform_5(%arg0: i32, %arg1: i32, %arg2: i32) -> (i32, i32) {
    %c0_i32 = arith.constant 0 : i32
    %c0_i32_0 = arith.constant 0 : i32
    %c0_i32_1 = arith.constant 0 : i32
    return %c0_i32, %c0_i32_0 : i32, i32
  }
  func.func @transform_6(%arg0: i32, %arg1: i32, %arg2: i32) -> (i32, i32) {
    %c0_i32 = arith.constant 0 : i32
    %c0_i32_0 = arith.constant 0 : i32
    %c0_i32_1 = arith.constant 0 : i32
    return %c0_i32, %c0_i32_0 : i32, i32
  }
  func.func @transform_7(%arg0: i32, %arg1: i32, %arg2: i32) -> (i32, i32) {
    %c0_i32 = arith.constant 0 : i32
    %c0_i32_0 = arith.constant 0 : i32
    %c0_i32_1 = arith.constant 0 : i32
    return %c0_i32, %c0_i32_0 : i32, i32
  }
  func.func @transform_8(%arg0: i32, %arg1: i32, %arg2: i32) -> (i32, i32) {
    %c0_i32 = arith.constant 0 : i32
    %c0_i32_0 = arith.constant 0 : i32
    %c0_i32_1 = arith.constant 0 : i32
    return %c0_i32, %c0_i32_0 : i32, i32
  }
  func.func @transform_9(%arg0: i32, %arg1: i32, %arg2: i32) -> (i32, i32) {
    %c0_i32 = arith.constant 0 : i32
    %c0_i32_0 = arith.constant 0 : i32
    %c0_i32_1 = arith.constant 0 : i32
    return %c0_i32, %c0_i32_0 : i32, i32
  }
  func.func @transform_10(%arg0: i32, %arg1: i32, %arg2: i32) -> (i32, i32, i32) {
    %c1_i32 = arith.constant 1 : i32
    %0 = arith.muli %arg1, %c1_i32 : i32
    %1 = arith.addi %0, %arg2 : i32
    %c0_i32 = arith.constant 0 : i32
    %c0_i32_0 = arith.constant 0 : i32
    return %arg0, %c0_i32, %1 : i32, i32, i32
  }
}

</mosaic_0001>

<llo_original>
// kernel: tpu_custom_call.1
$region0: #{tpu_custom_call.1}
  #allocation0 [shape = 'u32[]', space=smem, size = 0x4, offset = 0x4, fixed_abs, tag = 'smem constant byte address 0x4 - core index']
  #allocation1 [shape = 'u32[144,128]{1,0:T(1,128)}', space=vmem, size = 0x12000, scoped, tag = 'internal scratch']
  #allocation2 [shape = 'f32[1,1]{1,0:T(1,128)S(1)}', space=vmem, size = 0x200, scoped, tag = 'scoped memory for tpu_custom_call.1']
  %s0 = inlined_call_operand.vmem [shape: f32[2,128,1], index: 0, kind: input, shape index: {}]
  %s1 = inlined_call_operand.vmem [shape: f32[128,1], index: 1, kind: input, shape index: {}]
  %s2 = inlined_call_operand.vmem [shape: f32[128,1], index: 2, kind: input, shape index: {}]
  %s3 = inlined_call_operand.hbm [shape: f32[128,1024], index: 3, kind: input, shape index: {}]
  %s4 = inlined_call_operand.vmem [shape: bf16[64,128], index: 4, kind: input, shape index: {}]
  %s5 = inlined_call_operand.vmem [shape: f32[64,1], index: 5, kind: input, shape index: {}]
  %s6 = inlined_call_operand.vmem [shape: bf16[32,64], index: 6, kind: input, shape index: {}]
  %s7 = inlined_call_operand.vmem [shape: f32[32,1], index: 7, kind: input, shape index: {}]
  %s8 = inlined_call_operand.vmem [shape: f32[32,1], index: 8, kind: input, shape index: {}]
  %s9 = inlined_call_operand.<no memory space> [shape: f32[1,1], index: 9, kind: input, shape index: {}]
  %s10 = inlined_call_operand.hbm [shape: f32[2,1,32768], index: 10, kind: output, shape index: {}]
  %s11 = sld [smem:[#allocation0]]
  $region77: #{tpu_custom_call.1} parent=0
    _
  %s13 = ssub.s32 1, %s11
  %s14 = scalar_select 0, %s13, %s11
  %v15 = vstv %s9
  %16 = vst [vmem:[#allocation2] sm:$0x1] %v15
  $region1: #{tpu_custom_call.1} parent=0
    #allocation3 [shape = 'u8[524288]{0}', space=vmem, size = 0x80000, scoped, tag = 'input window, operand 3, single buffered']
    #allocation4 [shape = 's32[2]{0}', space=sflag, size = 0x8, scoped, tag = 'scoped memory for tpu_custom_call.1']
    #allocation5 [shape = 's32[2]{0}', space=sflag, size = 0x8, scoped, tag = 'scoped memory for tpu_custom_call.1']
    #allocation6 [shape = 'u8[8192]{0}', space=vmem, size = 0x2000, scoped, tag = 'output window, operand 0']
    %17 = vsyncpa [#allocation4], 0
    %18 = vsyncpa [#allocation5], 0
    %s19 = scalar_lea.sflag [#allocation5], 1
    %20 = vsyncpa %s19, 0
    loop: start=0, step=1, limit=66
    $region2: #{tpu_custom_call.1} parent=1 // loop_pre_header
      _
    $region3: #{tpu_custom_call.1} parent=1 // loop_header
      %s22 = sphi 0, %s26
      %p23 = scmp.ge.s32.totalorder %s22, 66
      %s29 = sphi 0, %s48
      %s30 = sphi 0, %s44
      %s31 = sphi 0, %s40
      %s32 = sphi 0, %s29
      %s33 = sphi 0, %s30
      %s34 = sphi 0, %s31
      %s35 = sphi 0, %s32
      %s36 = sphi 0, %s33
      %s37 = sphi 0, %s34
      %s51 = sphi 0, %s53
      %s54 = sphi 0, %s51
      %s55 = sphi 0, %s54
      %s71 = sphi 0, %s55
      %s75 = sphi 0, %s75
      %s77 = sphi 0, %s75
      %s78 = sphi 0, %s77
      %s92 = sphi 0, %s78
      %s96 = sphi 0, %s96
      %s98 = sphi 0, %s96
      %s99 = sphi 0, %s98
      %s113 = sphi 0, %s99
      %s117 = sphi 0, %s117
      %s119 = sphi 0, %s117
      %s120 = sphi 0, %s119
      %s134 = sphi 0, %s120
      %s138 = sphi 0, %s138
      %s140 = sphi 0, %s138
      %s141 = sphi 0, %s140
      %s155 = sphi 0, %s141
      %s159 = sphi 0, %s159
      %s161 = sphi 0, %s159
      %s162 = sphi 0, %s161
      %s176 = sphi 0, %s162
      %s180 = sphi 0, %s180
      %s182 = sphi 0, %s180
      %s183 = sphi 0, %s182
      %s197 = sphi 0, %s183
      %s201 = sphi 0, %s201
      %s203 = sphi 0, %s201
      %s204 = sphi 0, %s203
      %s218 = sphi 0, %s204
      %s222 = sphi 0, %s222
      %s224 = sphi 0, %s222
      %s225 = sphi 0, %s224
      %s239 = sphi 0, %s225
      %s243 = sphi 0, %s243
      %s245 = sphi 0, %s243
      %s246 = sphi 0, %s245
      %s260 = sphi 0, %s246
      %s270 = sphi 0, %s272
      %s273 = sphi 0, %s270
      %s274 = sphi 0, %s273
      %s290 = sphi 0, %s274
    $region4: #{tpu_custom_call.1} parent=1 // loop_header_branch
      %25 = sbr.rel (%p23) target = $region8
    $region5: #{tpu_custom_call.1} parent=1 // loop_body
      %s27 = ssub.s32 %s22, 1
      %s28 = ssub.s32 %s22, 2
      %s38 = sadd.s32 1, %s31
      %p39 = scmp.ge.s32.totalorder %s38, 1
      %s40 = scalar_select %p39, 0, %s38
      %s41 = sadd.s32 1, %s30
      %s42 = scalar_select %p39, %s41, %s30
      %p43 = scmp.ge.s32.totalorder %s42, 32
      %s44 = scalar_select %p43, 0, %s42
      %s45 = sadd.s32 1, %s29
      %s46 = scalar_select %p43, %s45, %s29
      %p47 = scmp.ge.s32.totalorder %s46, 2
      %s48 = scalar_select %p47, 0, %s46
      %s49 = ssub.s32 %s29, %s48
      %p50 = scmp.eq.s32.totalorder %s49, 0
      %s52 = sadd.s32 %s51, 1
      %s53 = scalar_select %p50, %s51, %s52
      %p56 = pneg %p50
      %p57 = scmp.eq.s32.totalorder %s22, 63
      %p58 = por %p56, %p57
      %p59 = scmp.ne.s32.totalorder %s51, %s54
      %p60 = scmp.eq.s32.totalorder %s22, 0
      %p61 = por %p59, %p60
      %p62 = scmp.ne.s32.totalorder %s51, %s54
      %p63 = scmp.eq.s32.totalorder %s27, 63
      %p64 = por %p62, %p63
      %p65 = scmp.ne.s32.totalorder %s54, %s55
      %p66 = scmp.eq.s32.totalorder %s27, 0
      %p67 = por %p65, %p66
      %p68 = scmp.ne.s32.totalorder %s54, %s55
      %p69 = scmp.eq.s32.totalorder %s28, 63
      %p70 = por %p68, %p69
      %p72 = scmp.ne.s32.totalorder %s55, %s71
      %p73 = scmp.eq.s32.totalorder %s28, 0
      %p74 = por %p72, %p73
      %s76 = sadd.s32 %s75, 1
      %p79 = scmp.eq.s32.totalorder %s22, 63
      %p80 = scmp.ne.s32.totalorder %s75, %s77
      %p81 = scmp.eq.s32.totalorder %s22, 0
      %p82 = por %p80, %p81
      %p83 = scmp.ne.s32.totalorder %s75, %s77
      %p84 = scmp.eq.s32.totalorder %s27, 63
      %p85 = por %p83, %p84
      %p86 = scmp.ne.s32.totalorder %s77, %s78
      %p87 = scmp.eq.s32.totalorder %s27, 0
      %p88 = por %p86, %p87
      %p89 = scmp.ne.s32.totalorder %s77, %s78
      %p90 = scmp.eq.s32.totalorder %s28, 63
      %p91 = por %p89, %p90
      %p93 = scmp.ne.s32.totalorder %s78, %s92
      %p94 = scmp.eq.s32.totalorder %s28, 0
      %p95 = por %p93, %p94
      %s97 = sadd.s32 %s96, 1
      %p100 = scmp.eq.s32.totalorder %s22, 63
      %p101 = scmp.ne.s32.totalorder %s96, %s98
      %p102 = scmp.eq.s32.totalorder %s22, 0
      %p103 = por %p101, %p102
      %p104 = scmp.ne.s32.totalorder %s96, %s98
      %p105 = scmp.eq.s32.totalorder %s27, 63
      %p106 = por %p104, %p105
      %p107 = scmp.ne.s32.totalorder %s98, %s99
      %p108 = scmp.eq.s32.totalorder %s27, 0
      %p109 = por %p107, %p108
      %p110 = scmp.ne.s32.totalorder %s98, %s99
      %p111 = scmp.eq.s32.totalorder %s28, 63
      %p112 = por %p110, %p111
      %p114 = scmp.ne.s32.totalorder %s99, %s113
      %p115 = scmp.eq.s32.totalorder %s28, 0
      %p116 = por %p114, %p115
      %s118 = sadd.s32 %s117, 1
      %p121 = scmp.eq.s32.totalorder %s22, 63
      %p122 = scmp.ne.s32.totalorder %s117, %s119
      %p123 = scmp.eq.s32.totalorder %s22, 0
      %p124 = por %p122, %p123
      %p125 = scmp.ne.s32.totalorder %s117, %s119
      %p126 = scmp.eq.s32.totalorder %s27, 63
      %p127 = por %p125, %p126
      %p128 = scmp.ne.s32.totalorder %s119, %s120
      %p129 = scmp.eq.s32.totalorder %s27, 0
      %p130 = por %p128, %p129
      %p131 = scmp.ne.s32.totalorder %s119, %s120
      %p132 = scmp.eq.s32.totalorder %s28, 63
      %p133 = por %p131, %p132
      %p135 = scmp.ne.s32.totalorder %s120, %s134
      %p136 = scmp.eq.s32.totalorder %s28, 0
      %p137 = por %p135, %p136
      %s139 = sadd.s32 %s138, 1
      %p142 = scmp.eq.s32.totalorder %s22, 63
      %p143 = scmp.ne.s32.totalorder %s138, %s140
      %p144 = scmp.eq.s32.totalorder %s22, 0
      %p145 = por %p143, %p144
      %p146 = scmp.ne.s32.totalorder %s138, %s140
      %p147 = scmp.eq.s32.totalorder %s27, 63
      %p148 = por %p146, %p147
      %p149 = scmp.ne.s32.totalorder %s140, %s141
      %p150 = scmp.eq.s32.totalorder %s27, 0
      %p151 = por %p149, %p150
      %p152 = scmp.ne.s32.totalorder %s140, %s141
      %p153 = scmp.eq.s32.totalorder %s28, 63
      %p154 = por %p152, %p153
      %p156 = scmp.ne.s32.totalorder %s141, %s155
      %p157 = scmp.eq.s32.totalorder %s28, 0
      %p158 = por %p156, %p157
      %s160 = sadd.s32 %s159, 1
      %p163 = scmp.eq.s32.totalorder %s22, 63
      %p164 = scmp.ne.s32.totalorder %s159, %s161
      %p165 = scmp.eq.s32.totalorder %s22, 0
      %p166 = por %p164, %p165
      %p167 = scmp.ne.s32.totalorder %s159, %s161
      %p168 = scmp.eq.s32.totalorder %s27, 63
      %p169 = por %p167, %p168
      %p170 = scmp.ne.s32.totalorder %s161, %s162
      %p171 = scmp.eq.s32.totalorder %s27, 0
      %p172 = por %p170, %p171
      %p173 = scmp.ne.s32.totalorder %s161, %s162
      %p174 = scmp.eq.s32.totalorder %s28, 63
      %p175 = por %p173, %p174
      %p177 = scmp.ne.s32.totalorder %s162, %s176
      %p178 = scmp.eq.s32.totalorder %s28, 0
      %p179 = por %p177, %p178
      %s181 = sadd.s32 %s180, 1
      %p184 = scmp.eq.s32.totalorder %s22, 63
      %p185 = scmp.ne.s32.totalorder %s180, %s182
      %p186 = scmp.eq.s32.totalorder %s22, 0
      %p187 = por %p185, %p186
      %p188 = scmp.ne.s32.totalorder %s180, %s182
      %p189 = scmp.eq.s32.totalorder %s27, 63
      %p190 = por %p188, %p189
      %p191 = scmp.ne.s32.totalorder %s182, %s183
      %p192 = scmp.eq.s32.totalorder %s27, 0
      %p193 = por %p191, %p192
      %p194 = scmp.ne.s32.totalorder %s182, %s183
      %p195 = scmp.eq.s32.totalorder %s28, 63
      %p196 = por %p194, %p195
      %p198 = scmp.ne.s32.totalorder %s183, %s197
      %p199 = scmp.eq.s32.totalorder %s28, 0
      %p200 = por %p198, %p199
      %s202 = sadd.s32 %s201, 1
      %p205 = scmp.eq.s32.totalorder %s22, 63
      %p206 = scmp.ne.s32.totalorder %s201, %s203
      %p207 = scmp.eq.s32.totalorder %s22, 0
      %p208 = por %p206, %p207
      %p209 = scmp.ne.s32.totalorder %s201, %s203
      %p210 = scmp.eq.s32.totalorder %s27, 63
      %p211 = por %p209, %p210
      %p212 = scmp.ne.s32.totalorder %s203, %s204
      %p213 = scmp.eq.s32.totalorder %s27, 0
      %p214 = por %p212, %p213
      %p215 = scmp.ne.s32.totalorder %s203, %s204
      %p216 = scmp.eq.s32.totalorder %s28, 63
      %p217 = por %p215, %p216
      %p219 = scmp.ne.s32.totalorder %s204, %s218
      %p220 = scmp.eq.s32.totalorder %s28, 0
      %p221 = por %p219, %p220
      %s223 = sadd.s32 %s222, 1
      %p226 = scmp.eq.s32.totalorder %s22, 63
      %p227 = scmp.ne.s32.totalorder %s222, %s224
      %p228 = scmp.eq.s32.totalorder %s22, 0
      %p229 = por %p227, %p228
      %p230 = scmp.ne.s32.totalorder %s222, %s224
      %p231 = scmp.eq.s32.totalorder %s27, 63
      %p232 = por %p230, %p231
      %p233 = scmp.ne.s32.totalorder %s224, %s225
      %p234 = scmp.eq.s32.totalorder %s27, 0
      %p235 = por %p233, %p234
      %p236 = scmp.ne.s32.totalorder %s224, %s225
      %p237 = scmp.eq.s32.totalorder %s28, 63
      %p238 = por %p236, %p237
      %p240 = scmp.ne.s32.totalorder %s225, %s239
      %p241 = scmp.eq.s32.totalorder %s28, 0
      %p242 = por %p240, %p241
      %s244 = sadd.s32 %s243, 1
      %p247 = scmp.eq.s32.totalorder %s22, 63
      %p248 = scmp.ne.s32.totalorder %s243, %s245
      %p249 = scmp.eq.s32.totalorder %s22, 0
      %p250 = por %p248, %p249
      %p251 = scmp.ne.s32.totalorder %s243, %s245
      %p252 = scmp.eq.s32.totalorder %s27, 63
      %p253 = por %p251, %p252
      %p254 = scmp.ne.s32.totalorder %s245, %s246
      %p255 = scmp.eq.s32.totalorder %s27, 0
      %p256 = por %p254, %p255
      %p257 = scmp.ne.s32.totalorder %s245, %s246
      %p258 = scmp.eq.s32.totalorder %s28, 63
      %p259 = por %p257, %p258
      %p261 = scmp.ne.s32.totalorder %s246, %s260
      %p262 = scmp.eq.s32.totalorder %s28, 0
      %p263 = por %p261, %p262
      %s264 = sadd.s32 %s30, %s31
      %s265 = sadd.s32 %s44, %s40
      %s266 = ssub.s32 %s29, %s48
      %s267 = ssub.s32 %s264, %s265
      %s268 = sor.u32 %s266, %s267
      %p269 = scmp.eq.s32.totalorder %s268, 0
      %s271 = sadd.s32 %s270, 1
      %s272 = scalar_select %p269, %s270, %s271
      %p275 = pneg %p269
      %p276 = scmp.eq.s32.totalorder %s22, 63
      %p277 = por %p275, %p276
      %p278 = scmp.ne.s32.totalorder %s270, %s273
      %p279 = scmp.eq.s32.totalorder %s22, 0
      %p280 = por %p278, %p279
      %p281 = scmp.ne.s32.totalorder %s270, %s273
      %p282 = scmp.eq.s32.totalorder %s27, 63
      %p283 = por %p281, %p282
      %p284 = scmp.ne.s32.totalorder %s273, %s274
      %p285 = scmp.eq.s32.totalorder %s27, 0
      %p286 = por %p284, %p285
      %p287 = scmp.ne.s32.totalorder %s273, %s274
      %p288 = scmp.eq.s32.totalorder %s28, 63
      %p289 = por %p287, %p288
      %p291 = scmp.ne.s32.totalorder %s274, %s290
      %p292 = scmp.eq.s32.totalorder %s28, 0
      %p293 = por %p291, %p292
      %p294 = scmp.le.s32.totalorder 1, %s22
      %p295 = scmp.lt.s32.totalorder %s22, 65
      %p296 = pnand %p294, %p295
      %p297 = pneg %p296
      // Predicated region
      $region9: #{tpu_custom_call.1} parent=5 // pred_check
        _
      $region10: #{tpu_custom_call.1} parent=5 // pred_check_branch
        %299 = sbr.rel (%p296) target = $region12
      $region11: #{tpu_custom_call.1} parent=5 // pred_region
        %s300 = ssub.s32 %s22, 1
        // Predicated region
        $region13: #{tpu_custom_call.1} parent=11 // pred_check
          %p301 = pneg %p88
        $region14: #{tpu_custom_call.1} parent=11 // pred_check_branch
          %303 = sbr.rel (%p301) target = $region16
        $region15: #{tpu_custom_call.1} parent=11 // pred_region
          _
        $region16: #{tpu_custom_call.1} parent=11 // pred_fallthru
          _
        // Predicated region
        $region17: #{tpu_custom_call.1} parent=11 // pred_check
          %p304 = pneg %p109
        $region18: #{tpu_custom_call.1} parent=11 // pred_check_branch
          %306 = sbr.rel (%p304) target = $region20
        $region19: #{tpu_custom_call.1} parent=11 // pred_region
          _
        $region20: #{tpu_custom_call.1} parent=11 // pred_fallthru
          _
        // Predicated region
        $region21: #{tpu_custom_call.1} parent=11 // pred_check
          %p307 = pneg %p130
        $region22: #{tpu_custom_call.1} parent=11 // pred_check_branch
          %309 = sbr.rel (%p307) target = $region24
        $region23: #{tpu_custom_call.1} parent=11 // pred_region
          %s311 = ssub.s32 16384, 16384
          %312 = vsyncadd [#allocation4], %s311
          %s313 = sshll.u32 [#allocation3], 4
          %s314 = int_to_ptr.vmem [resolvable:$true] %s313
          %319 = dma.hbm_to_vmem [thread:$0]  %s3, 16384, %s314, [#allocation4], 1024, 1024, 64
        $region24: #{tpu_custom_call.1} parent=11 // pred_fallthru
          _
        // Predicated region
        $region25: #{tpu_custom_call.1} parent=11 // pred_check
          %p320 = pneg %p151
        $region26: #{tpu_custom_call.1} parent=11 // pred_check_branch
          %322 = sbr.rel (%p320) target = $region28
        $region27: #{tpu_custom_call.1} parent=11 // pred_region
          _
        $region28: #{tpu_custom_call.1} parent=11 // pred_fallthru
          _
        // Predicated region
        $region29: #{tpu_custom_call.1} parent=11 // pred_check
          %p323 = pneg %p172
        $region30: #{tpu_custom_call.1} parent=11 // pred_check_branch
          %325 = sbr.rel (%p323) target = $region32
        $region31: #{tpu_custom_call.1} parent=11 // pred_region
          _
        $region32: #{tpu_custom_call.1} parent=11 // pred_fallthru
          _
        // Predicated region
        $region33: #{tpu_custom_call.1} parent=11 // pred_check
          %p326 = pneg %p193
        $region34: #{tpu_custom_call.1} parent=11 // pred_check_branch
          %328 = sbr.rel (%p326) target = $region36
        $region35: #{tpu_custom_call.1} parent=11 // pred_region
          _
        $region36: #{tpu_custom_call.1} parent=11 // pred_fallthru
          _
        // Predicated region
        $region37: #{tpu_custom_call.1} parent=11 // pred_check
          %p329 = pneg %p214
        $region38: #{tpu_custom_call.1} parent=11 // pred_check_branch
          %331 = sbr.rel (%p329) target = $region40
        $region39: #{tpu_custom_call.1} parent=11 // pred_region
          _
        $region40: #{tpu_custom_call.1} parent=11 // pred_fallthru
          _
        // Predicated region
        $region41: #{tpu_custom_call.1} parent=11 // pred_check
          %p332 = pneg %p235
        $region42: #{tpu_custom_call.1} parent=11 // pred_check_branch
          %334 = sbr.rel (%p332) target = $region44
        $region43: #{tpu_custom_call.1} parent=11 // pred_region
          _
        $region44: #{tpu_custom_call.1} parent=11 // pred_fallthru
          _
        // Predicated region
        $region45: #{tpu_custom_call.1} parent=11 // pred_check
          %p335 = pneg %p256
        $region46: #{tpu_custom_call.1} parent=11 // pred_check_branch
          %337 = sbr.rel (%p335) target = $region48
        $region47: #{tpu_custom_call.1} parent=11 // pred_region
          _
        $region48: #{tpu_custom_call.1} parent=11 // pred_fallthru
          _
      $region12: #{tpu_custom_call.1} parent=5 // pred_fallthru
        _
      %p338 = scmp.lt.s32.totalorder %s22, 64
      // Predicated region
      $region49: #{tpu_custom_call.1} parent=5 // pred_check
        %p339 = pneg %p338
      $region50: #{tpu_custom_call.1} parent=5 // pred_check_branch
        %341 = sbr.rel (%p339) target = $region52
      $region51: #{tpu_custom_call.1} parent=5 // pred_region
        // Predicated region
        $region53: #{tpu_custom_call.1} parent=51 // pred_check
          %p342 = pneg %p61
        $region54: #{tpu_custom_call.1} parent=51 // pred_check_branch
          %344 = sbr.rel (%p342) target = $region56
        $region55: #{tpu_custom_call.1} parent=51 // pred_region
          %p345 = scmp.lt.s32.totalorder %s29, 1
          %s346 = scalar_select %p345, %s29, 1
          %s347 = smul.addr %s346, 16
          %s348 = smul.addr %s347, 8
          %s349 = scalar_lea.vmem %s0, %s348
        $region56: #{tpu_custom_call.1} parent=51 // pred_fallthru
          _
      $region52: #{tpu_custom_call.1} parent=5 // pred_fallthru
        _
      %p350 = scmp.le.s32.totalorder 1, %s22
      %p351 = scmp.lt.s32.totalorder %s22, 65
      %p352 = pnand %p350, %p351
      %p353 = pneg %p352
      // Predicated region
      $region57: #{tpu_custom_call.1} parent=5 // pred_check
        _
      $region58: #{tpu_custom_call.1} parent=5 // pred_check_branch
        %355 = sbr.rel (%p352) target = $region60
      $region59: #{tpu_custom_call.1} parent=5 // pred_region
        %s356 = ssub.s32 %s22, 1
        // Predicated region
        $region61: #{tpu_custom_call.1} parent=59 // pred_check
          %p357 = pneg %p130
        $region62: #{tpu_custom_call.1} parent=59 // pred_check_branch
          %359 = sbr.rel (%p357) target = $region64
        $region63: #{tpu_custom_call.1} parent=59 // pred_region
          %360 = dma.done [#allocation4], 16384
        $region64: #{tpu_custom_call.1} parent=59 // pred_fallthru
          _
        %p361 = scmp.lt.s32.totalorder %s32, 1
        %s362 = scalar_select %p361, %s32, 1
        %s363 = smul.addr %s362, 16
        %s364 = smul.addr %s363, 8
        %s365 = scalar_lea.vmem %s0, %s364
        %p366 = pneg %p67
        %p367 = pneg %p64
        %p368 = pneg %p88
        %p369 = pneg %p85
        %p370 = pneg %p109
        %p371 = pneg %p106
        %p372 = pneg %p130
        %p373 = pneg %p127
        %p374 = pneg %p151
        %p375 = pneg %p148
        %p376 = pneg %p172
        %p377 = pneg %p169
        %p378 = pneg %p193
        %p379 = pneg %p190
        %p380 = pneg %p214
        %p381 = pneg %p211
        %p382 = pneg %p235
        %p383 = pneg %p232
        %p384 = pneg %p256
        %p385 = pneg %p253
        %p386 = pneg %p286
        %p387 = pneg %p283
        %s388 = sand.u32 %s273, 1
        %s389 = scalar_lea.sflag [#allocation5], %s388
        %s390 = sand.u32 %s273, 1
        %s391 = smul.addr %s390, 8
        %s392 = scalar_lea.vmem [#allocation6], %s391
        %p393 = scmp.lt.s32.totalorder %s32, 1
        %s394 = scalar_select %p393, %s32, 1
        %s395 = smul.addr %s394, 16
        %s396 = smul.addr %s395, 8
        %s397 = scalar_lea.vmem %s0, %s396
        %s398 = sadd.s32 %s33, %s34
        %s399 = smul.u32 8, %s398
        %s401 = scvt.s32.f32 %s33
        %s402 = smul.f32 %s401, 0.06451613
        %s403 = sadd.f32 %s402, -1.0
        %s404 = smul.u32 %s34, 32
        %s405 = scvt.s32.f32 %s404
        %s406 = smul.f32 %s405, 0.06451613
        %s407 = sadd.f32 %s406, -1.0
        %v408 = vld [vmem:[%s397] sm:$0xff]
        %v409 = vld [vmem:[%s397 + $0x8] sm:$0xff]
        %v410 = vld [vmem:[%s397 + $0x10] sm:$0xff]
        %v411 = vld [vmem:[%s397 + $0x18] sm:$0xff]
        %v412 = vld [vmem:[%s397 + $0x20] sm:$0xff]
        %v413 = vld [vmem:[%s397 + $0x28] sm:$0xff]
        %v414 = vld [vmem:[%s397 + $0x30] sm:$0xff]
        %v415 = vld [vmem:[%s397 + $0x38] sm:$0xff]
        %v416 = vld [vmem:[%s397 + $0x40] sm:$0xff]
        %v417 = vld [vmem:[%s397 + $0x48] sm:$0xff]
        %v418 = vld [vmem:[%s397 + $0x50] sm:$0xff]
        %v419 = vld [vmem:[%s397 + $0x58] sm:$0xff]
        %v420 = vld [vmem:[%s397 + $0x60] sm:$0xff]
        %v421 = vld [vmem:[%s397 + $0x68] sm:$0xff]
        %v422 = vld [vmem:[%s397 + $0x70] sm:$0xff]
        %v423 = vld [vmem:[%s397 + $0x78] sm:$0xff]
        %v424 = vld [vmem:[%s1] sm:$0xff]
        %v425 = vld [vmem:[%s1 + $0x8] sm:$0xff]
        %v426 = vld [vmem:[%s1 + $0x10] sm:$0xff]
        %v427 = vld [vmem:[%s1 + $0x18] sm:$0xff]
        %v428 = vld [vmem:[%s1 + $0x20] sm:$0xff]
        %v429 = vld [vmem:[%s1 + $0x28] sm:$0xff]
        %v430 = vld [vmem:[%s1 + $0x30] sm:$0xff]
        %v431 = vld [vmem:[%s1 + $0x38] sm:$0xff]
        %v432 = vld [vmem:[%s1 + $0x40] sm:$0xff]
        %v433 = vld [vmem:[%s1 + $0x48] sm:$0xff]
        %v434 = vld [vmem:[%s1 + $0x50] sm:$0xff]
        %v435 = vld [vmem:[%s1 + $0x58] sm:$0xff]
        %v436 = vld [vmem:[%s1 + $0x60] sm:$0xff]
        %v437 = vld [vmem:[%s1 + $0x68] sm:$0xff]
        %v438 = vld [vmem:[%s1 + $0x70] sm:$0xff]
        %v439 = vld [vmem:[%s1 + $0x78] sm:$0xff]
        %v440 = vstv %s403
        %v441 = vmul.f32 %v440, %v424
        %v442 = vmul.f32 %v440, %v425
        %v443 = vmul.f32 %v440, %v426
        %v444 = vmul.f32 %v440, %v427
        %v445 = vmul.f32 %v440, %v428
        %v446 = vmul.f32 %v440, %v429
        %v447 = vmul.f32 %v440, %v430
        %v448 = vmul.f32 %v440, %v431
        %v449 = vmul.f32 %v440, %v432
        %v450 = vmul.f32 %v440, %v433
        %v451 = vmul.f32 %v440, %v434
        %v452 = vmul.f32 %v440, %v435
        %v453 = vmul.f32 %v440, %v436
        %v454 = vmul.f32 %v440, %v437
        %v455 = vmul.f32 %v440, %v438
        %v456 = vmul.f32 %v440, %v439
        %v457 = vadd.f32 %v408, %v441
        %v458 = vadd.f32 %v409, %v442
        %v459 = vadd.f32 %v410, %v443
        %v460 = vadd.f32 %v411, %v444
        %v461 = vadd.f32 %v412, %v445
        %v462 = vadd.f32 %v413, %v446
        %v463 = vadd.f32 %v414, %v447
        %v464 = vadd.f32 %v415, %v448
        %v465 = vadd.f32 %v416, %v449
        %v466 = vadd.f32 %v417, %v450
        %v467 = vadd.f32 %v418, %v451
        %v468 = vadd.f32 %v419, %v452
        %v469 = vadd.f32 %v420, %v453
        %v470 = vadd.f32 %v421, %v454
        %v471 = vadd.f32 %v422, %v455
        %v472 = vadd.f32 %v423, %v456
        %v473 = vld [vmem:[%s2] sm:$0xff]
        %v474 = vld [vmem:[%s2 + $0x8] sm:$0xff]
        %v475 = vld [vmem:[%s2 + $0x10] sm:$0xff]
        %v476 = vld [vmem:[%s2 + $0x18] sm:$0xff]
        %v477 = vld [vmem:[%s2 + $0x20] sm:$0xff]
        %v478 = vld [vmem:[%s2 + $0x28] sm:$0xff]
        %v479 = vld [vmem:[%s2 + $0x30] sm:$0xff]
        %v480 = vld [vmem:[%s2 + $0x38] sm:$0xff]
        %v481 = vld [vmem:[%s2 + $0x40] sm:$0xff]
        %v482 = vld [vmem:[%s2 + $0x48] sm:$0xff]
        %v483 = vld [vmem:[%s2 + $0x50] sm:$0xff]
        %v484 = vld [vmem:[%s2 + $0x58] sm:$0xff]
        %v485 = vld [vmem:[%s2 + $0x60] sm:$0xff]
        %v486 = vld [vmem:[%s2 + $0x68] sm:$0xff]
        %v487 = vld [vmem:[%s2 + $0x70] sm:$0xff]
        %v488 = vld [vmem:[%s2 + $0x78] sm:$0xff]
        %v489 = vstv %s407
        %v490 = vmul.f32 %v489, %v473
        %v491 = vmul.f32 %v489, %v474
        %v492 = vmul.f32 %v489, %v475
        %v493 = vmul.f32 %v489, %v476
        %v494 = vmul.f32 %v489, %v477
        %v495 = vmul.f32 %v489, %v478
        %v496 = vmul.f32 %v489, %v479
        %v497 = vmul.f32 %v489, %v480
        %v498 = vmul.f32 %v489, %v481
        %v499 = vmul.f32 %v489, %v482
        %v500 = vmul.f32 %v489, %v483
        %v501 = vmul.f32 %v489, %v484
        %v502 = vmul.f32 %v489, %v485
        %v503 = vmul.f32 %v489, %v486
        %v504 = vmul.f32 %v489, %v487
        %v505 = vmul.f32 %v489, %v488
        %v506 = vadd.f32 %v457, %v490
        %v507 = vadd.f32 %v458, %v491
        %v508 = vadd.f32 %v459, %v492
        %v509 = vadd.f32 %v460, %v493
        %v510 = vadd.f32 %v461, %v494
        %v511 = vadd.f32 %v462, %v495
        %v512 = vadd.f32 %v463, %v496
        %v513 = vadd.f32 %v464, %v497
        %v514 = vadd.f32 %v465, %v498
        %v515 = vadd.f32 %v466, %v499
        %v516 = vadd.f32 %v467, %v500
        %v517 = vadd.f32 %v468, %v501
        %v518 = vadd.f32 %v469, %v502
        %v519 = vadd.f32 %v470, %v503
        %v520 = vadd.f32 %v471, %v504
        %v521 = vadd.f32 %v472, %v505
        %v522 = vld [vmem:[#allocation3] sm:$0xff]
        %v523 = vld [vmem:[#allocation3 + $0x8] sm:$0xff]
        %v524 = vld [vmem:[#allocation3 + $0x10] sm:$0xff]
        %v525 = vld [vmem:[#allocation3 + $0x18] sm:$0xff]
        %v526 = vld [vmem:[#allocation3 + $0x20] sm:$0xff]
        %v527 = vld [vmem:[#allocation3 + $0x28] sm:$0xff]
        %v528 = vld [vmem:[#allocation3 + $0x30] sm:$0xff]
        %v529 = vld [vmem:[#allocation3 + $0x38] sm:$0xff]
        %v530 = vld [vmem:[#allocation3 + $0x40] sm:$0xff]
        %v531 = vld [vmem:[#allocation3 + $0x48] sm:$0xff]
        %v532 = vld [vmem:[#allocation3 + $0x50] sm:$0xff]
        %v533 = vld [vmem:[#allocation3 + $0x58] sm:$0xff]
        %v534 = vld [vmem:[#allocation3 + $0x60] sm:$0xff]
        %v535 = vld [vmem:[#allocation3 + $0x68] sm:$0xff]
        %v536 = vld [vmem:[#allocation3 + $0x70] sm:$0xff]
        %v537 = vld [vmem:[#allocation3 + $0x78] sm:$0xff]
        %v538 = vld [vmem:[#allocation3 + $0x80] sm:$0xff]
        %v539 = vld [vmem:[#allocation3 + $0x88] sm:$0xff]
        %v540 = vld [vmem:[#allocation3 + $0x90] sm:$0xff]
        %v541 = vld [vmem:[#allocation3 + $0x98] sm:$0xff]
        %v542 = vld [vmem:[#allocation3 + $0xa0] sm:$0xff]
        %v543 = vld [vmem:[#allocation3 + $0xa8] sm:$0xff]
        %v544 = vld [vmem:[#allocation3 + $0xb0] sm:$0xff]
        %v545 = vld [vmem:[#allocation3 + $0xb8] sm:$0xff]
        %v546 = vld [vmem:[#allocation3 + $0xc0] sm:$0xff]
        %v547 = vld [vmem:[#allocation3 + $0xc8] sm:$0xff]
        %v548 = vld [vmem:[#allocation3 + $0xd0] sm:$0xff]
        %v549 = vld [vmem:[#allocation3 + $0xd8] sm:$0xff]
        %v550 = vld [vmem:[#allocation3 + $0xe0] sm:$0xff]
        %v551 = vld [vmem:[#allocation3 + $0xe8] sm:$0xff]
        %v552 = vld [vmem:[#allocation3 + $0xf0] sm:$0xff]
        %v553 = vld [vmem:[#allocation3 + $0xf8] sm:$0xff]
        %v554 = vld [vmem:[#allocation3 + $0x100] sm:$0xff]
        %v555 = vld [vmem:[#allocation3 + $0x108] sm:$0xff]
        %v556 = vld [vmem:[#allocation3 + $0x110] sm:$0xff]
        %v557 = vld [vmem:[#allocation3 + $0x118] sm:$0xff]
        %v558 = vld [vmem:[#allocation3 + $0x120] sm:$0xff]
        %v559 = vld [vmem:[#allocation3 + $0x128] sm:$0xff]
        %v560 = vld [vmem:[#allocation3 + $0x130] sm:$0xff]
        %v561 = vld [vmem:[#allocation3 + $0x138] sm:$0xff]
        %v562 = vld [vmem:[#allocation3 + $0x140] sm:$0xff]
        %v563 = vld [vmem:[#allocation3 + $0x148] sm:$0xff]
        %v564 = vld [vmem:[#allocation3 + $0x150] sm:$0xff]
        %v565 = vld [vmem:[#allocation3 + $0x158] sm:$0xff]
        %v566 = vld [vmem:[#allocation3 + $0x160] sm:$0xff]
        %v567 = vld [vmem:[#allocation3 + $0x168] sm:$0xff]
        %v568 = vld [vmem:[#allocation3 + $0x170] sm:$0xff]
        %v569 = vld [vmem:[#allocation3 + $0x178] sm:$0xff]
        %v570 = vld [vmem:[#allocation3 + $0x180] sm:$0xff]
        %v571 = vld [vmem:[#allocation3 + $0x188] sm:$0xff]
        %v572 = vld [vmem:[#allocation3 + $0x190] sm:$0xff]
        %v573 = vld [vmem:[#allocation3 + $0x198] sm:$0xff]
        %v574 = vld [vmem:[#allocation3 + $0x1a0] sm:$0xff]
        %v575 = vld [vmem:[#allocation3 + $0x1a8] sm:$0xff]
        %v576 = vld [vmem:[#allocation3 + $0x1b0] sm:$0xff]
        %v577 = vld [vmem:[#allocation3 + $0x1b8] sm:$0xff]
        %v578 = vld [vmem:[#allocation3 + $0x1c0] sm:$0xff]
        %v579 = vld [vmem:[#allocation3 + $0x1c8] sm:$0xff]
        %v580 = vld [vmem:[#allocation3 + $0x1d0] sm:$0xff]
        %v581 = vld [vmem:[#allocation3 + $0x1d8] sm:$0xff]
        %v582 = vld [vmem:[#allocation3 + $0x1e0] sm:$0xff]
        %v583 = vld [vmem:[#allocation3 + $0x1e8] sm:$0xff]
        %v584 = vld [vmem:[#allocation3 + $0x1f0] sm:$0xff]
        %v585 = vld [vmem:[#allocation3 + $0x1f8] sm:$0xff]
        %v586 = vld [vmem:[#allocation3 + $0x200] sm:$0xff]
        %v587 = vld [vmem:[#allocation3 + $0x208] sm:$0xff]
        %v588 = vld [vmem:[#allocation3 + $0x210] sm:$0xff]
        %v589 = vld [vmem:[#allocation3 + $0x218] sm:$0xff]
        %v590 = vld [vmem:[#allocation3 + $0x220] sm:$0xff]
        %v591 = vld [vmem:[#allocation3 + $0x228] sm:$0xff]
        %v592 = vld [vmem:[#allocation3 + $0x230] sm:$0xff]
        %v593 = vld [vmem:[#allocation3 + $0x238] sm:$0xff]
        %v594 = vld [vmem:[#allocation3 + $0x240] sm:$0xff]
        %v595 = vld [vmem:[#allocation3 + $0x248] sm:$0xff]
        %v596 = vld [vmem:[#allocation3 + $0x250] sm:$0xff]
        %v597 = vld [vmem:[#allocation3 + $0x258] sm:$0xff]
        %v598 = vld [vmem:[#allocation3 + $0x260] sm:$0xff]
        %v599 = vld [vmem:[#allocation3 + $0x268] sm:$0xff]
        %v600 = vld [vmem:[#allocation3 + $0x270] sm:$0xff]
        %v601 = vld [vmem:[#allocation3 + $0x278] sm:$0xff]
        %v602 = vld [vmem:[#allocation3 + $0x280] sm:$0xff]
        %v603 = vld [vmem:[#allocation3 + $0x288] sm:$0xff]
        %v604 = vld [vmem:[#allocation3 + $0x290] sm:$0xff]
        %v605 = vld [vmem:[#allocation3 + $0x298] sm:$0xff]
        %v606 = vld [vmem:[#allocation3 + $0x2a0] sm:$0xff]
        %v607 = vld [vmem:[#allocation3 + $0x2a8] sm:$0xff]
        %v608 = vld [vmem:[#allocation3 + $0x2b0] sm:$0xff]
        %v609 = vld [vmem:[#allocation3 + $0x2b8] sm:$0xff]
        %v610 = vld [vmem:[#allocation3 + $0x2c0] sm:$0xff]
        %v611 = vld [vmem:[#allocation3 + $0x2c8] sm:$0xff]
        %v612 = vld [vmem:[#allocation3 + $0x2d0] sm:$0xff]
        %v613 = vld [vmem:[#allocation3 + $0x2d8] sm:$0xff]
        %v614 = vld [vmem:[#allocation3 + $0x2e0] sm:$0xff]
        %v615 = vld [vmem:[#allocation3 + $0x2e8] sm:$0xff]
        %v616 = vld [vmem:[#allocation3 + $0x2f0] sm:$0xff]
        %v617 = vld [vmem:[#allocation3 + $0x2f8] sm:$0xff]
        %v618 = vld [vmem:[#allocation3 + $0x300] sm:$0xff]
        %v619 = vld [vmem:[#allocation3 + $0x308] sm:$0xff]
        %v620 = vld [vmem:[#allocation3 + $0x310] sm:$0xff]
        %v621 = vld [vmem:[#allocation3 + $0x318] sm:$0xff]
        %v622 = vld [vmem:[#allocation3 + $0x320] sm:$0xff]
        %v623 = vld [vmem:[#allocation3 + $0x328] sm:$0xff]
        %v624 = vld [vmem:[#allocation3 + $0x330] sm:$0xff]
        %v625 = vld [vmem:[#allocation3 + $0x338] sm:$0xff]
        %v626 = vld [vmem:[#allocation3 + $0x340] sm:$0xff]
        %v627 = vld [vmem:[#allocation3 + $0x348] sm:$0xff]
        %v628 = vld [vmem:[#allocation3 + $0x350] sm:$0xff]
        %v629 = vld [vmem:[#allocation3 + $0x358] sm:$0xff]
        %v630 = vld [vmem:[#allocation3 + $0x360] sm:$0xff]
        %v631 = vld [vmem:[#allocation3 + $0x368] sm:$0xff]
        %v632 = vld [vmem:[#allocation3 + $0x370] sm:$0xff]
        %v633 = vld [vmem:[#allocation3 + $0x378] sm:$0xff]
        %v634 = vld [vmem:[#allocation3 + $0x380] sm:$0xff]
        %v635 = vld [vmem:[#allocation3 + $0x388] sm:$0xff]
        %v636 = vld [vmem:[#allocation3 + $0x390] sm:$0xff]
        %v637 = vld [vmem:[#allocation3 + $0x398] sm:$0xff]
        %v638 = vld [vmem:[#allocation3 + $0x3a0] sm:$0xff]
        %v639 = vld [vmem:[#allocation3 + $0x3a8] sm:$0xff]
        %v640 = vld [vmem:[#allocation3 + $0x3b0] sm:$0xff]
        %v641 = vld [vmem:[#allocation3 + $0x3b8] sm:$0xff]
        %v642 = vld [vmem:[#allocation3 + $0x3c0] sm:$0xff]
        %v643 = vld [vmem:[#allocation3 + $0x3c8] sm:$0xff]
        %v644 = vld [vmem:[#allocation3 + $0x3d0] sm:$0xff]
        %v645 = vld [vmem:[#allocation3 + $0x3d8] sm:$0xff]
        %v646 = vld [vmem:[#allocation3 + $0x3e0] sm:$0xff]
        %v647 = vld [vmem:[#allocation3 + $0x3e8] sm:$0xff]
        %v648 = vld [vmem:[#allocation3 + $0x3f0] sm:$0xff]
        %v649 = vld [vmem:[#allocation3 + $0x3f8] sm:$0xff]
        %651 = vset.pattern.permute.xlu0 0
        %652 = vperm.xlu0 %651, %v506
        %v653 = vpop.permute.xlu0 %652
        %656 = vset.pattern.permute.xlu0 0
        %657 = vperm.xlu0 %656, %v507
        %v658 = vpop.permute.xlu0 %657
        %661 = vset.pattern.permute.xlu0 0
        %662 = vperm.xlu0 %661, %v508
        %v663 = vpop.permute.xlu0 %662
        %666 = vset.pattern.permute.xlu0 0
        %667 = vperm.xlu0 %666, %v509
        %v668 = vpop.permute.xlu0 %667
        %671 = vset.pattern.permute.xlu0 0
        %672 = vperm.xlu0 %671, %v510
        %v673 = vpop.permute.xlu0 %672
        %676 = vset.pattern.permute.xlu0 0
        %677 = vperm.xlu0 %676, %v511
        %v678 = vpop.permute.xlu0 %677
        %681 = vset.pattern.permute.xlu0 0
        %682 = vperm.xlu0 %681, %v512
        %v683 = vpop.permute.xlu0 %682
        %686 = vset.pattern.permute.xlu0 0
        %687 = vperm.xlu0 %686, %v513
        %v688 = vpop.permute.xlu0 %687
        %691 = vset.pattern.permute.xlu0 0
        %692 = vperm.xlu0 %691, %v514
        %v693 = vpop.permute.xlu0 %692
        %696 = vset.pattern.permute.xlu0 0
        %697 = vperm.xlu0 %696, %v515
        %v698 = vpop.permute.xlu0 %697
        %701 = vset.pattern.permute.xlu0 0
        %702 = vperm.xlu0 %701, %v516
        %v703 = vpop.permute.xlu0 %702
        %706 = vset.pattern.permute.xlu0 0
        %707 = vperm.xlu0 %706, %v517
        %v708 = vpop.permute.xlu0 %707
        %711 = vset.pattern.permute.xlu0 0
        %712 = vperm.xlu0 %711, %v518
        %v713 = vpop.permute.xlu0 %712
        %716 = vset.pattern.permute.xlu0 0
        %717 = vperm.xlu0 %716, %v519
        %v718 = vpop.permute.xlu0 %717
        %721 = vset.pattern.permute.xlu0 0
        %722 = vperm.xlu0 %721, %v520
        %v723 = vpop.permute.xlu0 %722
        %726 = vset.pattern.permute.xlu0 0
        %727 = vperm.xlu0 %726, %v521
        %v728 = vpop.permute.xlu0 %727
        %v730 = vadd.f32 %v522, %v653
        %v731 = vadd.f32 %v523, %v653
        %v732 = vadd.f32 %v524, %v653
        %v733 = vadd.f32 %v525, %v653
        %v734 = vadd.f32 %v526, %v653
        %v735 = vadd.f32 %v527, %v653
        %v736 = vadd.f32 %v528, %v653
        %v737 = vadd.f32 %v529, %v653
        %v738 = vadd.f32 %v530, %v658
        %v739 = vadd.f32 %v531, %v658
        %v740 = vadd.f32 %v532, %v658
        %v741 = vadd.f32 %v533, %v658
        %v742 = vadd.f32 %v534, %v658
        %v743 = vadd.f32 %v535, %v658
        %v744 = vadd.f32 %v536, %v658
        %v745 = vadd.f32 %v537, %v658
        %v746 = vadd.f32 %v538, %v663
        %v747 = vadd.f32 %v539, %v663
        %v748 = vadd.f32 %v540, %v663
        %v749 = vadd.f32 %v541, %v663
        %v750 = vadd.f32 %v542, %v663
        %v751 = vadd.f32 %v543, %v663
        %v752 = vadd.f32 %v544, %v663
        %v753 = vadd.f32 %v545, %v663
        %v754 = vadd.f32 %v546, %v668
        %v755 = vadd.f32 %v547, %v668
        %v756 = vadd.f32 %v548, %v668
        %v757 = vadd.f32 %v549, %v668
        %v758 = vadd.f32 %v550, %v668
        %v759 = vadd.f32 %v551, %v668
        %v760 = vadd.f32 %v552, %v668
        %v761 = vadd.f32 %v553, %v668
        %v762 = vadd.f32 %v554, %v673
        %v763 = vadd.f32 %v555, %v673
        %v764 = vadd.f32 %v556, %v673
        %v765 = vadd.f32 %v557, %v673
        %v766 = vadd.f32 %v558, %v673
        %v767 = vadd.f32 %v559, %v673
        %v768 = vadd.f32 %v560, %v673
        %v769 = vadd.f32 %v561, %v673
        %v770 = vadd.f32 %v562, %v678
        %v771 = vadd.f32 %v563, %v678
        %v772 = vadd.f32 %v564, %v678
        %v773 = vadd.f32 %v565, %v678
        %v774 = vadd.f32 %v566, %v678
        %v775 = vadd.f32 %v567, %v678
        %v776 = vadd.f32 %v568, %v678
        %v777 = vadd.f32 %v569, %v678
        %v778 = vadd.f32 %v570, %v683
        %v779 = vadd.f32 %v571, %v683
        %v780 = vadd.f32 %v572, %v683
        %v781 = vadd.f32 %v573, %v683
        %v782 = vadd.f32 %v574, %v683
        %v783 = vadd.f32 %v575, %v683
        %v784 = vadd.f32 %v576, %v683
        %v785 = vadd.f32 %v577, %v683
        %v786 = vadd.f32 %v578, %v688
        %v787 = vadd.f32 %v579, %v688
        %v788 = vadd.f32 %v580, %v688
        %v789 = vadd.f32 %v581, %v688
        %v790 = vadd.f32 %v582, %v688
        %v791 = vadd.f32 %v583, %v688
        %v792 = vadd.f32 %v584, %v688
        %v793 = vadd.f32 %v585, %v688
        %v794 = vadd.f32 %v586, %v693
        %v795 = vadd.f32 %v587, %v693
        %v796 = vadd.f32 %v588, %v693
        %v797 = vadd.f32 %v589, %v693
        %v798 = vadd.f32 %v590, %v693
        %v799 = vadd.f32 %v591, %v693
        %v800 = vadd.f32 %v592, %v693
        %v801 = vadd.f32 %v593, %v693
        %v802 = vadd.f32 %v594, %v698
        %v803 = vadd.f32 %v595, %v698
        %v804 = vadd.f32 %v596, %v698
        %v805 = vadd.f32 %v597, %v698
        %v806 = vadd.f32 %v598, %v698
        %v807 = vadd.f32 %v599, %v698
        %v808 = vadd.f32 %v600, %v698
        %v809 = vadd.f32 %v601, %v698
        %v810 = vadd.f32 %v602, %v703
        %v811 = vadd.f32 %v603, %v703
        %v812 = vadd.f32 %v604, %v703
        %v813 = vadd.f32 %v605, %v703
        %v814 = vadd.f32 %v606, %v703
        %v815 = vadd.f32 %v607, %v703
        %v816 = vadd.f32 %v608, %v703
        %v817 = vadd.f32 %v609, %v703
        %v818 = vadd.f32 %v610, %v708
        %v819 = vadd.f32 %v611, %v708
        %v820 = vadd.f32 %v612, %v708
        %v821 = vadd.f32 %v613, %v708
        %v822 = vadd.f32 %v614, %v708
        %v823 = vadd.f32 %v615, %v708
        %v824 = vadd.f32 %v616, %v708
        %v825 = vadd.f32 %v617, %v708
        %v826 = vadd.f32 %v618, %v713
        %v827 = vadd.f32 %v619, %v713
        %v828 = vadd.f32 %v620, %v713
        %v829 = vadd.f32 %v621, %v713
        %v830 = vadd.f32 %v622, %v713
        %v831 = vadd.f32 %v623, %v713
        %v832 = vadd.f32 %v624, %v713
        %v833 = vadd.f32 %v625, %v713
        %v834 = vadd.f32 %v626, %v718
        %v835 = vadd.f32 %v627, %v718
        %v836 = vadd.f32 %v628, %v718
        %v837 = vadd.f32 %v629, %v718
        %v838 = vadd.f32 %v630, %v718
        %v839 = vadd.f32 %v631, %v718
        %v840 = vadd.f32 %v632, %v718
        %v841 = vadd.f32 %v633, %v718
        %v842 = vadd.f32 %v634, %v723
        %v843 = vadd.f32 %v635, %v723
        %v844 = vadd.f32 %v636, %v723
        %v845 = vadd.f32 %v637, %v723
        %v846 = vadd.f32 %v638, %v723
        %v847 = vadd.f32 %v639, %v723
        %v848 = vadd.f32 %v640, %v723
        %v849 = vadd.f32 %v641, %v723
        %v850 = vadd.f32 %v642, %v728
        %v851 = vadd.f32 %v643, %v728
        %v852 = vadd.f32 %v644, %v728
        %v853 = vadd.f32 %v645, %v728
        %v854 = vadd.f32 %v646, %v728
        %v855 = vadd.f32 %v647, %v728
        %v856 = vadd.f32 %v648, %v728
        %v857 = vadd.f32 %v649, %v728
        %v858 = vmax.f32 %v730, 0.0
        %v859 = vmax.f32 %v731, 0.0
        %v860 = vmax.f32 %v732, 0.0
        %v861 = vmax.f32 %v733, 0.0
        %v862 = vmax.f32 %v734, 0.0
        %v863 = vmax.f32 %v735, 0.0
        %v864 = vmax.f32 %v736, 0.0
        %v865 = vmax.f32 %v737, 0.0
        %v866 = vmax.f32 %v738, 0.0
        %v867 = vmax.f32 %v739, 0.0
        %v868 = vmax.f32 %v740, 0.0
        %v869 = vmax.f32 %v741, 0.0
        %v870 = vmax.f32 %v742, 0.0
        %v871 = vmax.f32 %v743, 0.0
        %v872 = vmax.f32 %v744, 0.0
        %v873 = vmax.f32 %v745, 0.0
        %v874 = vmax.f32 %v746, 0.0
        %v875 = vmax.f32 %v747, 0.0
        %v876 = vmax.f32 %v748, 0.0
        %v877 = vmax.f32 %v749, 0.0
        %v878 = vmax.f32 %v750, 0.0
        %v879 = vmax.f32 %v751, 0.0
        %v880 = vmax.f32 %v752, 0.0
        %v881 = vmax.f32 %v753, 0.0
        %v882 = vmax.f32 %v754, 0.0
        %v883 = vmax.f32 %v755, 0.0
        %v884 = vmax.f32 %v756, 0.0
        %v885 = vmax.f32 %v757, 0.0
        %v886 = vmax.f32 %v758, 0.0
        %v887 = vmax.f32 %v759, 0.0
        %v888 = vmax.f32 %v760, 0.0
        %v889 = vmax.f32 %v761, 0.0
        %v890 = vmax.f32 %v762, 0.0
        %v891 = vmax.f32 %v763, 0.0
        %v892 = vmax.f32 %v764, 0.0
        %v893 = vmax.f32 %v765, 0.0
        %v894 = vmax.f32 %v766, 0.0
        %v895 = vmax.f32 %v767, 0.0
        %v896 = vmax.f32 %v768, 0.0
        %v897 = vmax.f32 %v769, 0.0
        %v898 = vmax.f32 %v770, 0.0
        %v899 = vmax.f32 %v771, 0.0
        %v900 = vmax.f32 %v772, 0.0
        %v901 = vmax.f32 %v773, 0.0
        %v902 = vmax.f32 %v774, 0.0
        %v903 = vmax.f32 %v775, 0.0
        %v904 = vmax.f32 %v776, 0.0
        %v905 = vmax.f32 %v777, 0.0
        %v906 = vmax.f32 %v778, 0.0
        %v907 = vmax.f32 %v779, 0.0
        %v908 = vmax.f32 %v780, 0.0
        %v909 = vmax.f32 %v781, 0.0
        %v910 = vmax.f32 %v782, 0.0
        %v911 = vmax.f32 %v783, 0.0
        %v912 = vmax.f32 %v784, 0.0
        %v913 = vmax.f32 %v785, 0.0
        %v914 = vmax.f32 %v786, 0.0
        %v915 = vmax.f32 %v787, 0.0
        %v916 = vmax.f32 %v788, 0.0
        %v917 = vmax.f32 %v789, 0.0
        %v918 = vmax.f32 %v790, 0.0
        %v919 = vmax.f32 %v791, 0.0
        %v920 = vmax.f32 %v792, 0.0
        %v921 = vmax.f32 %v793, 0.0
        %v922 = vmax.f32 %v794, 0.0
        %v923 = vmax.f32 %v795, 0.0
        %v924 = vmax.f32 %v796, 0.0
        %v925 = vmax.f32 %v797, 0.0
        %v926 = vmax.f32 %v798, 0.0
        %v927 = vmax.f32 %v799, 0.0
        %v928 = vmax.f32 %v800, 0.0
        %v929 = vmax.f32 %v801, 0.0
        %v930 = vmax.f32 %v802, 0.0
        %v931 = vmax.f32 %v803, 0.0
        %v932 = vmax.f32 %v804, 0.0
        %v933 = vmax.f32 %v805, 0.0
        %v934 = vmax.f32 %v806, 0.0
        %v935 = vmax.f32 %v807, 0.0
        %v936 = vmax.f32 %v808, 0.0
        %v937 = vmax.f32 %v809, 0.0
        %v938 = vmax.f32 %v810, 0.0
        %v939 = vmax.f32 %v811, 0.0
        %v940 = vmax.f32 %v812, 0.0
        %v941 = vmax.f32 %v813, 0.0
        %v942 = vmax.f32 %v814, 0.0
        %v943 = vmax.f32 %v815, 0.0
        %v944 = vmax.f32 %v816, 0.0
        %v945 = vmax.f32 %v817, 0.0
        %v946 = vmax.f32 %v818, 0.0
        %v947 = vmax.f32 %v819, 0.0
        %v948 = vmax.f32 %v820, 0.0
        %v949 = vmax.f32 %v821, 0.0
        %v950 = vmax.f32 %v822, 0.0
        %v951 = vmax.f32 %v823, 0.0
        %v952 = vmax.f32 %v824, 0.0
        %v953 = vmax.f32 %v825, 0.0
        %v954 = vmax.f32 %v826, 0.0
        %v955 = vmax.f32 %v827, 0.0
        %v956 = vmax.f32 %v828, 0.0
        %v957 = vmax.f32 %v829, 0.0
        %v958 = vmax.f32 %v830, 0.0
        %v959 = vmax.f32 %v831, 0.0
        %v960 = vmax.f32 %v832, 0.0
        %v961 = vmax.f32 %v833, 0.0
        %v962 = vmax.f32 %v834, 0.0
        %v963 = vmax.f32 %v835, 0.0
        %v964 = vmax.f32 %v836, 0.0
        %v965 = vmax.f32 %v837, 0.0
        %v966 = vmax.f32 %v838, 0.0
        %v967 = vmax.f32 %v839, 0.0
        %v968 = vmax.f32 %v840, 0.0
        %v969 = vmax.f32 %v841, 0.0
        %v970 = vmax.f32 %v842, 0.0
        %v971 = vmax.f32 %v843, 0.0
        %v972 = vmax.f32 %v844, 0.0
        %v973 = vmax.f32 %v845, 0.0
        %v974 = vmax.f32 %v846, 0.0
        %v975 = vmax.f32 %v847, 0.0
        %v976 = vmax.f32 %v848, 0.0
        %v977 = vmax.f32 %v849, 0.0
        %v978 = vmax.f32 %v850, 0.0
        %v979 = vmax.f32 %v851, 0.0
        %v980 = vmax.f32 %v852, 0.0
        %v981 = vmax.f32 %v853, 0.0
        %v982 = vmax.f32 %v854, 0.0
        %v983 = vmax.f32 %v855, 0.0
        %v984 = vmax.f32 %v856, 0.0
        %v985 = vmax.f32 %v857, 0.0
        %v986 = vpack.c.bf16 %v866, %v858
        %v987 = vpack.c.bf16 %v867, %v859
        %v988 = vpack.c.bf16 %v868, %v860
        %v989 = vpack.c.bf16 %v869, %v861
        %v990 = vpack.c.bf16 %v870, %v862
        %v991 = vpack.c.bf16 %v871, %v863
        %v992 = vpack.c.bf16 %v872, %v864
        %v993 = vpack.c.bf16 %v873, %v865
        %v994 = vpack.c.bf16 %v882, %v874
        %v995 = vpack.c.bf16 %v883, %v875
        %v996 = vpack.c.bf16 %v884, %v876
        %v997 = vpack.c.bf16 %v885, %v877
        %v998 = vpack.c.bf16 %v886, %v878
        %v999 = vpack.c.bf16 %v887, %v879
        %v1000 = vpack.c.bf16 %v888, %v880
        %v1001 = vpack.c.bf16 %v889, %v881
        %v1002 = vpack.c.bf16 %v898, %v890
        %v1003 = vpack.c.bf16 %v899, %v891
        %v1004 = vpack.c.bf16 %v900, %v892
        %v1005 = vpack.c.bf16 %v901, %v893
        %v1006 = vpack.c.bf16 %v902, %v894
        %v1007 = vpack.c.bf16 %v903, %v895
        %v1008 = vpack.c.bf16 %v904, %v896
        %v1009 = vpack.c.bf16 %v905, %v897
        %v1010 = vpack.c.bf16 %v914, %v906
        %v1011 = vpack.c.bf16 %v915, %v907
        %v1012 = vpack.c.bf16 %v916, %v908
        %v1013 = vpack.c.bf16 %v917, %v909
        %v1014 = vpack.c.bf16 %v918, %v910
        %v1015 = vpack.c.bf16 %v919, %v911
        %v1016 = vpack.c.bf16 %v920, %v912
        %v1017 = vpack.c.bf16 %v921, %v913
        %v1018 = vpack.c.bf16 %v930, %v922
        %v1019 = vpack.c.bf16 %v931, %v923
        %v1020 = vpack.c.bf16 %v932, %v924
        %v1021 = vpack.c.bf16 %v933, %v925
        %v1022 = vpack.c.bf16 %v934, %v926
        %v1023 = vpack.c.bf16 %v935, %v927
        %v1024 = vpack.c.bf16 %v936, %v928
        %v1025 = vpack.c.bf16 %v937, %v929
        %v1026 = vpack.c.bf16 %v946, %v938
        %v1027 = vpack.c.bf16 %v947, %v939
        %v1028 = vpack.c.bf16 %v948, %v940
        %v1029 = vpack.c.bf16 %v949, %v941
        %v1030 = vpack.c.bf16 %v950, %v942
        %v1031 = vpack.c.bf16 %v951, %v943
        %v1032 = vpack.c.bf16 %v952, %v944
        %v1033 = vpack.c.bf16 %v953, %v945
        %v1034 = vpack.c.bf16 %v962, %v954
        %v1035 = vpack.c.bf16 %v963, %v955
        %v1036 = vpack.c.bf16 %v964, %v956
        %v1037 = vpack.c.bf16 %v965, %v957
        %v1038 = vpack.c.bf16 %v966, %v958
        %v1039 = vpack.c.bf16 %v967, %v959
        %v1040 = vpack.c.bf16 %v968, %v960
        %v1041 = vpack.c.bf16 %v969, %v961
        %v1042 = vpack.c.bf16 %v978, %v970
        %v1043 = vpack.c.bf16 %v979, %v971
        %v1044 = vpack.c.bf16 %v980, %v972
        %v1045 = vpack.c.bf16 %v981, %v973
        %v1046 = vpack.c.bf16 %v982, %v974
        %v1047 = vpack.c.bf16 %v983, %v975
        %v1048 = vpack.c.bf16 %v984, %v976
        %v1049 = vpack.c.bf16 %v985, %v977
        %v1050 = vld [vmem:[%s4] sm:$0xf]
        %v1051 = vld [vmem:[%s4 + $0x4] sm:$0xf]
        %v1052 = vld [vmem:[%s4 + $0x8] sm:$0xf]
        %v1053 = vld [vmem:[%s4 + $0xc] sm:$0xf]
        %v1054 = vld [vmem:[%s4 + $0x10] sm:$0xf]
        %v1055 = vld [vmem:[%s4 + $0x14] sm:$0xf]
        %v1056 = vld [vmem:[%s4 + $0x18] sm:$0xf]
        %v1057 = vld [vmem:[%s4 + $0x1c] sm:$0xf]
        %v1058 = vld [vmem:[%s5] sm:$0xff]
        %v1059 = vld [vmem:[%s5 + $0x8] sm:$0xff]
        %v1060 = vld [vmem:[%s5 + $0x10] sm:$0xff]
        %v1061 = vld [vmem:[%s5 + $0x18] sm:$0xff]
        %v1062 = vld [vmem:[%s5 + $0x20] sm:$0xff]
        %v1063 = vld [vmem:[%s5 + $0x28] sm:$0xff]
        %v1064 = vld [vmem:[%s5 + $0x30] sm:$0xff]
        %v1065 = vld [vmem:[%s5 + $0x38] sm:$0xff]
        %1067 = vset.pattern.permute.xlu0 0
        %1068 = vperm.xlu0 %1067, %v1058
        %v1069 = vpop.permute.xlu0 %1068
        %1072 = vset.pattern.permute.xlu0 0
        %1073 = vperm.xlu0 %1072, %v1059
        %v1074 = vpop.permute.xlu0 %1073
        %1077 = vset.pattern.permute.xlu0 0
        %1078 = vperm.xlu0 %1077, %v1060
        %v1079 = vpop.permute.xlu0 %1078
        %1082 = vset.pattern.permute.xlu0 0
        %1083 = vperm.xlu0 %1082, %v1061
        %v1084 = vpop.permute.xlu0 %1083
        %1087 = vset.pattern.permute.xlu0 0
        %1088 = vperm.xlu0 %1087, %v1062
        %v1089 = vpop.permute.xlu0 %1088
        %1092 = vset.pattern.permute.xlu0 0
        %1093 = vperm.xlu0 %1092, %v1063
        %v1094 = vpop.permute.xlu0 %1093
        %1097 = vset.pattern.permute.xlu0 0
        %1098 = vperm.xlu0 %1097, %v1064
        %v1099 = vpop.permute.xlu0 %1098
        %1102 = vset.pattern.permute.xlu0 0
        %1103 = vperm.xlu0 %1102, %v1065
        %v1104 = vpop.permute.xlu0 %1103
        %v1114 = vunpack.c.l.b16 %v1050
        %v1115 = vunpack.c.l.b16 %v1051
        %v1116 = vunpack.c.l.b16 %v1052
        %v1117 = vunpack.c.l.b16 %v1053
        %v1118 = vunpack.c.l.b16 %v1054
        %v1119 = vunpack.c.l.b16 %v1055
        %v1120 = vunpack.c.l.b16 %v1056
        %v1121 = vunpack.c.l.b16 %v1057
        %v1122 = vpack.c.b16 %v1115, %v1114
        %v1123 = vpack.c.b16 %v1117, %v1116
        %v1124 = vpack.c.b16 %v1119, %v1118
        %v1125 = vpack.c.b16 %v1121, %v1120
        %1130 = vmatprep.subr.bf16.mxu0 %v987
        %1131 = vmatpush1.bf16.msra.mxu0 %v986
        %1132 = vmatprep.subr.bf16.mxu0 %v995
        %1133 = vmatpush1.bf16.msra.mxu0 %v994
        %1134 = vmatprep.subr.bf16.mxu0 %v1003
        %1135 = vmatpush1.bf16.msra.mxu0 %v1002
        %1136 = vmatprep.subr.bf16.mxu0 %v1011
        %1137 = vmatpush1.bf16.msra.mxu0 %v1010
        %1138 = vmatprep.subr.bf16.mxu0 %v1019
        %1139 = vmatpush1.bf16.msra.mxu0 %v1018
        %1140 = vmatprep.subr.bf16.mxu0 %v1027
        %1141 = vmatpush1.bf16.msra.mxu0 %v1026
        %1142 = vmatprep.subr.bf16.mxu0 %v1035
        %1143 = vmatpush1.bf16.msra.mxu0 %v1034
        %1144 = vmatprep.subr.bf16.mxu0 %v1043
        %1145 = vmatpush1.bf16.msra.mxu0 %v1042
        %1146 = vmatprep.subr.bf16.mxu0 0
        %1147 = vmatpush1.bf16.msra.mxu0 0
        %1148 = vmatprep.subr.bf16.mxu0 0
        %1149 = vmatpush1.bf16.msra.mxu0 0
        %1150 = vmatprep.subr.bf16.mxu0 0
        %1151 = vmatpush1.bf16.msra.mxu0 0
        %1152 = vmatprep.subr.bf16.mxu0 0
        %1153 = vmatpush1.bf16.msra.mxu0 0
        %1154 = vmatprep.subr.bf16.mxu0 0
        %1155 = vmatpush1.bf16.msra.mxu0 0
        %1156 = vmatprep.subr.bf16.mxu0 0
        %1157 = vmatpush1.bf16.msra.mxu0 0
        %1158 = vmatprep.subr.bf16.mxu0 0
        %1159 = vmatpush1.bf16.msra.mxu0 0
        %1160 = vmatprep.subr.bf16.mxu0 0
        %1161 = vmatpush1.bf16.msra.mxu0 0
        %1162 = vmatprep.mubr.bf16.mxu0 0
        %1163 = vmatmul.mubr.bf16.gmra.mrb[0].mxu0 %v1122
        %v1164 = vpop.f32.mrb[0].mxu0
        %v1165 = vadd.f32 %v1069, %v1164
        %v1166 = vpop.f32.mrb[0].mxu0
        %v1167 = vadd.f32 %v1069, %v1166
        %v1168 = vpop.f32.mrb[0].mxu0
        %v1169 = vadd.f32 %v1074, %v1168
        %v1170 = vpop.f32.mrb[0].mxu0
        %v1171 = vadd.f32 %v1074, %v1170
        %1172 = vmatprep.mubr.bf16.mxu0 0
        %1173 = vmatmul.mubr.bf16.gmra.mrb[0].mxu0 %v1123
        %v1174 = vpop.f32.mrb[0].mxu0
        %v1175 = vadd.f32 %v1079, %v1174
        %v1176 = vpop.f32.mrb[0].mxu0
        %v1177 = vadd.f32 %v1079, %v1176
        %v1178 = vpop.f32.mrb[0].mxu0
        %v1179 = vadd.f32 %v1084, %v1178
        %v1180 = vpop.f32.mrb[0].mxu0
        %v1181 = vadd.f32 %v1084, %v1180
        %1182 = vmatprep.mubr.bf16.mxu0 0
        %1183 = vmatmul.mubr.bf16.gmra.mrb[0].mxu0 %v1124
        %v1184 = vpop.f32.mrb[0].mxu0
        %v1185 = vadd.f32 %v1089, %v1184
        %v1186 = vpop.f32.mrb[0].mxu0
        %v1187 = vadd.f32 %v1089, %v1186
        %v1188 = vpop.f32.mrb[0].mxu0
        %v1189 = vadd.f32 %v1094, %v1188
        %v1190 = vpop.f32.mrb[0].mxu0
        %v1191 = vadd.f32 %v1094, %v1190
        %1192 = vmatprep.mubr.bf16.mxu0 0
        %1193 = vmatmul.mubr.bf16.gmra.mrb[0].mxu0 %v1125
        %v1194 = vpop.f32.mrb[0].mxu0
        %v1195 = vadd.f32 %v1099, %v1194
        %v1196 = vpop.f32.mrb[0].mxu0
        %v1197 = vadd.f32 %v1099, %v1196
        %v1198 = vpop.f32.mrb[0].mxu0
        %v1199 = vadd.f32 %v1104, %v1198
        %v1200 = vpop.f32.mrb[0].mxu0
        %v1201 = vadd.f32 %v1104, %v1200
        %1202 = vdwg.mxu0
        %1203 = vmatprep.subr.bf16.mxu0 %v989
        %1204 = vmatpush1.bf16.msra.mxu0 %v988
        %1205 = vmatprep.subr.bf16.mxu0 %v997
        %1206 = vmatpush1.bf16.msra.mxu0 %v996
        %1207 = vmatprep.subr.bf16.mxu0 %v1005
        %1208 = vmatpush1.bf16.msra.mxu0 %v1004
        %1209 = vmatprep.subr.bf16.mxu0 %v1013
        %1210 = vmatpush1.bf16.msra.mxu0 %v1012
        %1211 = vmatprep.subr.bf16.mxu0 %v1021
        %1212 = vmatpush1.bf16.msra.mxu0 %v1020
        %1213 = vmatprep.subr.bf16.mxu0 %v1029
        %1214 = vmatpush1.bf16.msra.mxu0 %v1028
        %1215 = vmatprep.subr.bf16.mxu0 %v1037
        %1216 = vmatpush1.bf16.msra.mxu0 %v1036
        %1217 = vmatprep.subr.bf16.mxu0 %v1045
        %1218 = vmatpush1.bf16.msra.mxu0 %v1044
        %1219 = vmatprep.subr.bf16.mxu0 0
        %1220 = vmatpush1.bf16.msra.mxu0 0
        %1221 = vmatprep.subr.bf16.mxu0 0
        %1222 = vmatpush1.bf16.msra.mxu0 0
        %1223 = vmatprep.subr.bf16.mxu0 0
        %1224 = vmatpush1.bf16.msra.mxu0 0
        %1225 = vmatprep.subr.bf16.mxu0 0
        %1226 = vmatpush1.bf16.msra.mxu0 0
        %1227 = vmatprep.subr.bf16.mxu0 0
        %1228 = vmatpush1.bf16.msra.mxu0 0
        %1229 = vmatprep.subr.bf16.mxu0 0
        %1230 = vmatpush1.bf16.msra.mxu0 0
        %1231 = vmatprep.subr.bf16.mxu0 0
        %1232 = vmatpush1.bf16.msra.mxu0 0
        %1233 = vmatprep.subr.bf16.mxu0 0
        %1234 = vmatpush1.bf16.msra.mxu0 0
        %1235 = vmatprep.mubr.bf16.mxu0 0
        %1236 = vmatmul.mubr.bf16.gmra.mrb[0].mxu0 %v1122
        %v1237 = vpop.f32.mrb[0].mxu0
        %v1238 = vadd.f32 %v1069, %v1237
        %v1239 = vpop.f32.mrb[0].mxu0
        %v1240 = vadd.f32 %v1069, %v1239
        %v1241 = vpop.f32.mrb[0].mxu0
        %v1242 = vadd.f32 %v1074, %v1241
        %v1243 = vpop.f32.mrb[0].mxu0
        %v1244 = vadd.f32 %v1074, %v1243
        %1245 = vmatprep.mubr.bf16.mxu0 0
        %1246 = vmatmul.mubr.bf16.gmra.mrb[0].mxu0 %v1123
        %v1247 = vpop.f32.mrb[0].mxu0
        %v1248 = vadd.f32 %v1079, %v1247
        %v1249 = vpop.f32.mrb[0].mxu0
        %v1250 = vadd.f32 %v1079, %v1249
        %v1251 = vpop.f32.mrb[0].mxu0
        %v1252 = vadd.f32 %v1084, %v1251
        %v1253 = vpop.f32.mrb[0].mxu0
        %v1254 = vadd.f32 %v1084, %v1253
        %1255 = vmatprep.mubr.bf16.mxu0 0
        %1256 = vmatmul.mubr.bf16.gmra.mrb[0].mxu0 %v1124
        %v1257 = vpop.f32.mrb[0].mxu0
        %v1258 = vadd.f32 %v1089, %v1257
        %v1259 = vpop.f32.mrb[0].mxu0
        %v1260 = vadd.f32 %v1089, %v1259
        %v1261 = vpop.f32.mrb[0].mxu0
        %v1262 = vadd.f32 %v1094, %v1261
        %v1263 = vpop.f32.mrb[0].mxu0
        %v1264 = vadd.f32 %v1094, %v1263
        %1265 = vmatprep.mubr.bf16.mxu0 0
        %1266 = vmatmul.mubr.bf16.gmra.mrb[0].mxu0 %v1125
        %v1267 = vpop.f32.mrb[0].mxu0
        %v1268 = vadd.f32 %v1099, %v1267
        %v1269 = vpop.f32.mrb[0].mxu0
        %v1270 = vadd.f32 %v1099, %v1269
        %v1271 = vpop.f32.mrb[0].mxu0
        %v1272 = vadd.f32 %v1104, %v1271
        %v1273 = vpop.f32.mrb[0].mxu0
        %v1274 = vadd.f32 %v1104, %v1273
        %1275 = vdwg.mxu0
        %1276 = vmatprep.subr.bf16.mxu0 %v991
        %1277 = vmatpush1.bf16.msra.mxu0 %v990
        %1278 = vmatprep.subr.bf16.mxu0 %v999
        %1279 = vmatpush1.bf16.msra.mxu0 %v998
        %1280 = vmatprep.subr.bf16.mxu0 %v1007
        %1281 = vmatpush1.bf16.msra.mxu0 %v1006
        %1282 = vmatprep.subr.bf16.mxu0 %v1015
        %1283 = vmatpush1.bf16.msra.mxu0 %v1014
        %1284 = vmatprep.subr.bf16.mxu0 %v1023
        %1285 = vmatpush1.bf16.msra.mxu0 %v1022
        %1286 = vmatprep.subr.bf16.mxu0 %v1031
        %1287 = vmatpush1.bf16.msra.mxu0 %v1030
        %1288 = vmatprep.subr.bf16.mxu0 %v1039
        %1289 = vmatpush1.bf16.msra.mxu0 %v1038
        %1290 = vmatprep.subr.bf16.mxu0 %v1047
        %1291 = vmatpush1.bf16.msra.mxu0 %v1046
        %1292 = vmatprep.subr.bf16.mxu0 0
        %1293 = vmatpush1.bf16.msra.mxu0 0
        %1294 = vmatprep.subr.bf16.mxu0 0
        %1295 = vmatpush1.bf16.msra.mxu0 0
        %1296 = vmatprep.subr.bf16.mxu0 0
        %1297 = vmatpush1.bf16.msra.mxu0 0
        %1298 = vmatprep.subr.bf16.mxu0 0
        %1299 = vmatpush1.bf16.msra.mxu0 0
        %1300 = vmatprep.subr.bf16.mxu0 0
        %1301 = vmatpush1.bf16.msra.mxu0 0
        %1302 = vmatprep.subr.bf16.mxu0 0
        %1303 = vmatpush1.bf16.msra.mxu0 0
        %1304 = vmatprep.subr.bf16.mxu0 0
        %1305 = vmatpush1.bf16.msra.mxu0 0
        %1306 = vmatprep.subr.bf16.mxu0 0
        %1307 = vmatpush1.bf16.msra.mxu0 0
        %1308 = vmatprep.mubr.bf16.mxu0 0
        %1309 = vmatmul.mubr.bf16.gmra.mrb[0].mxu0 %v1122
        %v1310 = vpop.f32.mrb[0].mxu0
        %v1311 = vadd.f32 %v1069, %v1310
        %v1312 = vpop.f32.mrb[0].mxu0
        %v1313 = vadd.f32 %v1069, %v1312
        %v1314 = vpop.f32.mrb[0].mxu0
        %v1315 = vadd.f32 %v1074, %v1314
        %v1316 = vpop.f32.mrb[0].mxu0
        %v1317 = vadd.f32 %v1074, %v1316
        %1318 = vmatprep.mubr.bf16.mxu0 0
        %1319 = vmatmul.mubr.bf16.gmra.mrb[0].mxu0 %v1123
        %v1320 = vpop.f32.mrb[0].mxu0
        %v1321 = vadd.f32 %v1079, %v1320
        %v1322 = vpop.f32.mrb[0].mxu0
        %v1323 = vadd.f32 %v1079, %v1322
        %v1324 = vpop.f32.mrb[0].mxu0
        %v1325 = vadd.f32 %v1084, %v1324
        %v1326 = vpop.f32.mrb[0].mxu0
        %v1327 = vadd.f32 %v1084, %v1326
        %1328 = vmatprep.mubr.bf16.mxu0 0
        %1329 = vmatmul.mubr.bf16.gmra.mrb[0].mxu0 %v1124
        %v1330 = vpop.f32.mrb[0].mxu0
        %v1331 = vadd.f32 %v1089, %v1330
        %v1332 = vpop.f32.mrb[0].mxu0
        %v1333 = vadd.f32 %v1089, %v1332
        %v1334 = vpop.f32.mrb[0].mxu0
        %v1335 = vadd.f32 %v1094, %v1334
        %v1336 = vpop.f32.mrb[0].mxu0
        %v1337 = vadd.f32 %v1094, %v1336
        %1338 = vmatprep.mubr.bf16.mxu0 0
        %1339 = vmatmul.mubr.bf16.gmra.mrb[0].mxu0 %v1125
        %v1340 = vpop.f32.mrb[0].mxu0
        %v1341 = vadd.f32 %v1099, %v1340
        %v1342 = vpop.f32.mrb[0].mxu0
        %v1343 = vadd.f32 %v1099, %v1342
        %v1344 = vpop.f32.mrb[0].mxu0
        %v1345 = vadd.f32 %v1104, %v1344
        %v1346 = vpop.f32.mrb[0].mxu0
        %v1347 = vadd.f32 %v1104, %v1346
        %1348 = vdwg.mxu0
        %1349 = vmatprep.subr.bf16.mxu0 %v993
        %1350 = vmatpush1.bf16.msra.mxu0 %v992
        %1351 = vmatprep.subr.bf16.mxu0 %v1001
        %1352 = vmatpush1.bf16.msra.mxu0 %v1000
        %1353 = vmatprep.subr.bf16.mxu0 %v1009
        %1354 = vmatpush1.bf16.msra.mxu0 %v1008
        %1355 = vmatprep.subr.bf16.mxu0 %v1017
        %1356 = vmatpush1.bf16.msra.mxu0 %v1016
        %1357 = vmatprep.subr.bf16.mxu0 %v1025
        %1358 = vmatpush1.bf16.msra.mxu0 %v1024
        %1359 = vmatprep.subr.bf16.mxu0 %v1033
        %1360 = vmatpush1.bf16.msra.mxu0 %v1032
        %1361 = vmatprep.subr.bf16.mxu0 %v1041
        %1362 = vmatpush1.bf16.msra.mxu0 %v1040
        %1363 = vmatprep.subr.bf16.mxu0 %v1049
        %1364 = vmatpush1.bf16.msra.mxu0 %v1048
        %1365 = vmatprep.subr.bf16.mxu0 0
        %1366 = vmatpush1.bf16.msra.mxu0 0
        %1367 = vmatprep.subr.bf16.mxu0 0
        %1368 = vmatpush1.bf16.msra.mxu0 0
        %1369 = vmatprep.subr.bf16.mxu0 0
        %1370 = vmatpush1.bf16.msra.mxu0 0
        %1371 = vmatprep.subr.bf16.mxu0 0
        %1372 = vmatpush1.bf16.msra.mxu0 0
        %1373 = vmatprep.subr.bf16.mxu0 0
        %1374 = vmatpush1.bf16.msra.mxu0 0
        %1375 = vmatprep.subr.bf16.mxu0 0
        %1376 = vmatpush1.bf16.msra.mxu0 0
        %1377 = vmatprep.subr.bf16.mxu0 0
        %1378 = vmatpush1.bf16.msra.mxu0 0
        %1379 = vmatprep.subr.bf16.mxu0 0
        %1380 = vmatpush1.bf16.msra.mxu0 0
        %1381 = vmatprep.mubr.bf16.mxu0 0
        %1382 = vmatmul.mubr.bf16.gmra.mrb[0].mxu0 %v1122
        %v1383 = vpop.f32.mrb[0].mxu0
        %v1384 = vadd.f32 %v1069, %v1383
        %v1385 = vpop.f32.mrb[0].mxu0
        %v1386 = vadd.f32 %v1069, %v1385
        %v1387 = vpop.f32.mrb[0].mxu0
        %v1388 = vadd.f32 %v1074, %v1387
        %v1389 = vpop.f32.mrb[0].mxu0
        %v1390 = vadd.f32 %v1074, %v1389
        %1391 = vmatprep.mubr.bf16.mxu0 0
        %1392 = vmatmul.mubr.bf16.gmra.mrb[0].mxu0 %v1123
        %v1393 = vpop.f32.mrb[0].mxu0
        %v1394 = vadd.f32 %v1079, %v1393
        %v1395 = vpop.f32.mrb[0].mxu0
        %v1396 = vadd.f32 %v1079, %v1395
        %v1397 = vpop.f32.mrb[0].mxu0
        %v1398 = vadd.f32 %v1084, %v1397
        %v1399 = vpop.f32.mrb[0].mxu0
        %v1400 = vadd.f32 %v1084, %v1399
        %1401 = vmatprep.mubr.bf16.mxu0 0
        %1402 = vmatmul.mubr.bf16.gmra.mrb[0].mxu0 %v1124
        %v1403 = vpop.f32.mrb[0].mxu0
        %v1404 = vadd.f32 %v1089, %v1403
        %v1405 = vpop.f32.mrb[0].mxu0
        %v1406 = vadd.f32 %v1089, %v1405
        %v1407 = vpop.f32.mrb[0].mxu0
        %v1408 = vadd.f32 %v1094, %v1407
        %v1409 = vpop.f32.mrb[0].mxu0
        %v1410 = vadd.f32 %v1094, %v1409
        %1411 = vmatprep.mubr.bf16.mxu0 0
        %1412 = vmatmul.mubr.bf16.gmra.mrb[0].mxu0 %v1125
        %v1413 = vpop.f32.mrb[0].mxu0
        %v1414 = vadd.f32 %v1099, %v1413
        %v1415 = vpop.f32.mrb[0].mxu0
        %v1416 = vadd.f32 %v1099, %v1415
        %v1417 = vpop.f32.mrb[0].mxu0
        %v1418 = vadd.f32 %v1104, %v1417
        %v1419 = vpop.f32.mrb[0].mxu0
        %v1420 = vadd.f32 %v1104, %v1419
        %1421 = vdwg.mxu0
        %v1422 = vmax.f32 %v1165, 0.0
        %v1423 = vmax.f32 %v1167, 0.0
        %v1424 = vmax.f32 %v1238, 0.0
        %v1425 = vmax.f32 %v1240, 0.0
        %v1426 = vmax.f32 %v1311, 0.0
        %v1427 = vmax.f32 %v1313, 0.0
        %v1428 = vmax.f32 %v1384, 0.0
        %v1429 = vmax.f32 %v1386, 0.0
        %v1430 = vmax.f32 %v1169, 0.0
        %v1431 = vmax.f32 %v1171, 0.0
        %v1432 = vmax.f32 %v1242, 0.0
        %v1433 = vmax.f32 %v1244, 0.0
        %v1434 = vmax.f32 %v1315, 0.0
        %v1435 = vmax.f32 %v1317, 0.0
        %v1436 = vmax.f32 %v1388, 0.0
        %v1437 = vmax.f32 %v1390, 0.0
        %v1438 = vmax.f32 %v1175, 0.0
        %v1439 = vmax.f32 %v1177, 0.0
        %v1440 = vmax.f32 %v1248, 0.0
        %v1441 = vmax.f32 %v1250, 0.0
        %v1442 = vmax.f32 %v1321, 0.0
        %v1443 = vmax.f32 %v1323, 0.0
        %v1444 = vmax.f32 %v1394, 0.0
        %v1445 = vmax.f32 %v1396, 0.0
        %v1446 = vmax.f32 %v1179, 0.0
        %v1447 = vmax.f32 %v1181, 0.0
        %v1448 = vmax.f32 %v1252, 0.0
        %v1449 = vmax.f32 %v1254, 0.0
        %v1450 = vmax.f32 %v1325, 0.0
        %v1451 = vmax.f32 %v1327, 0.0
        %v1452 = vmax.f32 %v1398, 0.0
        %v1453 = vmax.f32 %v1400, 0.0
        %v1454 = vmax.f32 %v1185, 0.0
        %v1455 = vmax.f32 %v1187, 0.0
        %v1456 = vmax.f32 %v1258, 0.0
        %v1457 = vmax.f32 %v1260, 0.0
        %v1458 = vmax.f32 %v1331, 0.0
        %v1459 = vmax.f32 %v1333, 0.0
        %v1460 = vmax.f32 %v1404, 0.0
        %v1461 = vmax.f32 %v1406, 0.0
        %v1462 = vmax.f32 %v1189, 0.0
        %v1463 = vmax.f32 %v1191, 0.0
        %v1464 = vmax.f32 %v1262, 0.0
        %v1465 = vmax.f32 %v1264, 0.0
        %v1466 = vmax.f32 %v1335, 0.0
        %v1467 = vmax.f32 %v1337, 0.0
        %v1468 = vmax.f32 %v1408, 0.0
        %v1469 = vmax.f32 %v1410, 0.0
        %v1470 = vmax.f32 %v1195, 0.0
        %v1471 = vmax.f32 %v1197, 0.0
        %v1472 = vmax.f32 %v1268, 0.0
        %v1473 = vmax.f32 %v1270, 0.0
        %v1474 = vmax.f32 %v1341, 0.0
        %v1475 = vmax.f32 %v1343, 0.0
        %v1476 = vmax.f32 %v1414, 0.0
        %v1477 = vmax.f32 %v1416, 0.0
        %v1478 = vmax.f32 %v1199, 0.0
        %v1479 = vmax.f32 %v1201, 0.0
        %v1480 = vmax.f32 %v1272, 0.0
        %v1481 = vmax.f32 %v1274, 0.0
        %v1482 = vmax.f32 %v1345, 0.0
        %v1483 = vmax.f32 %v1347, 0.0
        %v1484 = vmax.f32 %v1418, 0.0
        %v1485 = vmax.f32 %v1420, 0.0
        %v1486 = vpack.c.bf16 %v1430, %v1422
        %v1487 = vpack.c.bf16 %v1431, %v1423
        %v1488 = vpack.c.bf16 %v1432, %v1424
        %v1489 = vpack.c.bf16 %v1433, %v1425
        %v1490 = vpack.c.bf16 %v1434, %v1426
        %v1491 = vpack.c.bf16 %v1435, %v1427
        %v1492 = vpack.c.bf16 %v1436, %v1428
        %v1493 = vpack.c.bf16 %v1437, %v1429
        %v1494 = vpack.c.bf16 %v1446, %v1438
        %v1495 = vpack.c.bf16 %v1447, %v1439
        %v1496 = vpack.c.bf16 %v1448, %v1440
        %v1497 = vpack.c.bf16 %v1449, %v1441
        %v1498 = vpack.c.bf16 %v1450, %v1442
        %v1499 = vpack.c.bf16 %v1451, %v1443
        %v1500 = vpack.c.bf16 %v1452, %v1444
        %v1501 = vpack.c.bf16 %v1453, %v1445
        %v1502 = vpack.c.bf16 %v1462, %v1454
        %v1503 = vpack.c.bf16 %v1463, %v1455
        %v1504 = vpack.c.bf16 %v1464, %v1456
        %v1505 = vpack.c.bf16 %v1465, %v1457
        %v1506 = vpack.c.bf16 %v1466, %v1458
        %v1507 = vpack.c.bf16 %v1467, %v1459
        %v1508 = vpack.c.bf16 %v1468, %v1460
        %v1509 = vpack.c.bf16 %v1469, %v1461
        %v1510 = vpack.c.bf16 %v1478, %v1470
        %v1511 = vpack.c.bf16 %v1479, %v1471
        %v1512 = vpack.c.bf16 %v1480, %v1472
        %v1513 = vpack.c.bf16 %v1481, %v1473
        %v1514 = vpack.c.bf16 %v1482, %v1474
        %v1515 = vpack.c.bf16 %v1483, %v1475
        %v1516 = vpack.c.bf16 %v1484, %v1476
        %v1517 = vpack.c.bf16 %v1485, %v1477
        %v1518 = vld [vmem:[%s6] sm:$0xf]
        %v1519 = vld [vmem:[%s6 + $0x4] sm:$0xf]
        %v1520 = vld [vmem:[%s6 + $0x8] sm:$0xf]
        %v1521 = vld [vmem:[%s6 + $0xc] sm:$0xf]
        %v1522 = vld [vmem:[%s7] sm:$0xff]
        %v1523 = vld [vmem:[%s7 + $0x8] sm:$0xff]
        %v1524 = vld [vmem:[%s7 + $0x10] sm:$0xff]
        %v1525 = vld [vmem:[%s7 + $0x18] sm:$0xff]
        %1527 = vset.pattern.permute.xlu0 0
        %1528 = vperm.xlu0 %1527, %v1522
        %v1529 = vpop.permute.xlu0 %1528
        %1532 = vset.pattern.permute.xlu0 0
        %1533 = vperm.xlu0 %1532, %v1523
        %v1534 = vpop.permute.xlu0 %1533
        %1537 = vset.pattern.permute.xlu0 0
        %1538 = vperm.xlu0 %1537, %v1524
        %v1539 = vpop.permute.xlu0 %1538
        %1542 = vset.pattern.permute.xlu0 0
        %1543 = vperm.xlu0 %1542, %v1525
        %v1544 = vpop.permute.xlu0 %1543
        %v1550 = vunpack.c.l.b16 %v1518
        %v1551 = vunpack.c.l.b16 %v1519
        %v1552 = vunpack.c.l.b16 %v1520
        %v1553 = vunpack.c.l.b16 %v1521
        %v1554 = vpack.c.b16 %v1551, %v1550
        %v1555 = vpack.c.b16 %v1553, %v1552
        %vm1556 = vcmask 523264
        %v1558 = vsel %vm1556, %v1554, 0
        %v1561 = vsel %vm1556, %v1555, 0
        %1563 = vmatprep.subr.bf16.mxu0 %v1487
        %1564 = vmatpush1.bf16.msra.mxu0 %v1486
        %1565 = vmatprep.subr.bf16.mxu0 %v1495
        %1566 = vmatpush1.bf16.msra.mxu0 %v1494
        %1567 = vmatprep.subr.bf16.mxu0 %v1503
        %1568 = vmatpush1.bf16.msra.mxu0 %v1502
        %1569 = vmatprep.subr.bf16.mxu0 %v1511
        %1570 = vmatpush1.bf16.msra.mxu0 %v1510
        %1571 = vmatprep.subr.bf16.mxu0 0
        %1572 = vmatpush1.bf16.msra.mxu0 0
        %1573 = vmatprep.subr.bf16.mxu0 0
        %1574 = vmatpush1.bf16.msra.mxu0 0
        %1575 = vmatprep.subr.bf16.mxu0 0
        %1576 = vmatpush1.bf16.msra.mxu0 0
        %1577 = vmatprep.subr.bf16.mxu0 0
        %1578 = vmatpush1.bf16.msra.mxu0 0
        %1579 = vmatprep.subr.bf16.mxu0 0
        %1580 = vmatpush1.bf16.msra.mxu0 0
        %1581 = vmatprep.subr.bf16.mxu0 0
        %1582 = vmatpush1.bf16.msra.mxu0 0
        %1583 = vmatprep.subr.bf16.mxu0 0
        %1584 = vmatpush1.bf16.msra.mxu0 0
        %1585 = vmatprep.subr.bf16.mxu0 0
        %1586 = vmatpush1.bf16.msra.mxu0 0
        %1587 = vmatprep.subr.bf16.mxu0 0
        %1588 = vmatpush1.bf16.msra.mxu0 0
        %1589 = vmatprep.subr.bf16.mxu0 0
        %1590 = vmatpush1.bf16.msra.mxu0 0
        %1591 = vmatprep.subr.bf16.mxu0 0
        %1592 = vmatpush1.bf16.msra.mxu0 0
        %1593 = vmatprep.subr.bf16.mxu0 0
        %1594 = vmatpush1.bf16.msra.mxu0 0
        %1595 = vmatprep.mubr.bf16.mxu0 0
        %1596 = vmatmul.mubr.bf16.gmra.mrb[0].mxu0 %v1558
        %v1597 = vpop.f32.mrb[0].mxu0
        %v1598 = vadd.f32 %v1529, %v1597
        %v1599 = vpop.f32.mrb[0].mxu0
        %v1600 = vadd.f32 %v1529, %v1599
        %v1601 = vpop.f32.mrb[0].mxu0
        %v1602 = vadd.f32 %v1534, %v1601
        %v1603 = vpop.f32.mrb[0].mxu0
        %v1604 = vadd.f32 %v1534, %v1603
        %1605 = vmatprep.mubr.bf16.mxu0 0
        %1606 = vmatmul.mubr.bf16.gmra.mrb[0].mxu0 %v1561
        %v1607 = vpop.f32.mrb[0].mxu0
        %v1608 = vadd.f32 %v1539, %v1607
        %v1609 = vpop.f32.mrb[0].mxu0
        %v1610 = vadd.f32 %v1539, %v1609
        %v1611 = vpop.f32.mrb[0].mxu0
        %v1612 = vadd.f32 %v1544, %v1611
        %v1613 = vpop.f32.mrb[0].mxu0
        %v1614 = vadd.f32 %v1544, %v1613
        %1615 = vdwg.mxu0
        %1616 = vmatprep.subr.bf16.mxu0 %v1489
        %1617 = vmatpush1.bf16.msra.mxu0 %v1488
        %1618 = vmatprep.subr.bf16.mxu0 %v1497
        %1619 = vmatpush1.bf16.msra.mxu0 %v1496
        %1620 = vmatprep.subr.bf16.mxu0 %v1505
        %1621 = vmatpush1.bf16.msra.mxu0 %v1504
        %1622 = vmatprep.subr.bf16.mxu0 %v1513
        %1623 = vmatpush1.bf16.msra.mxu0 %v1512
        %1624 = vmatprep.subr.bf16.mxu0 0
        %1625 = vmatpush1.bf16.msra.mxu0 0
        %1626 = vmatprep.subr.bf16.mxu0 0
        %1627 = vmatpush1.bf16.msra.mxu0 0
        %1628 = vmatprep.subr.bf16.mxu0 0
        %1629 = vmatpush1.bf16.msra.mxu0 0
        %1630 = vmatprep.subr.bf16.mxu0 0
        %1631 = vmatpush1.bf16.msra.mxu0 0
        %1632 = vmatprep.subr.bf16.mxu0 0
        %1633 = vmatpush1.bf16.msra.mxu0 0
        %1634 = vmatprep.subr.bf16.mxu0 0
        %1635 = vmatpush1.bf16.msra.mxu0 0
        %1636 = vmatprep.subr.bf16.mxu0 0
        %1637 = vmatpush1.bf16.msra.mxu0 0
        %1638 = vmatprep.subr.bf16.mxu0 0
        %1639 = vmatpush1.bf16.msra.mxu0 0
        %1640 = vmatprep.subr.bf16.mxu0 0
        %1641 = vmatpush1.bf16.msra.mxu0 0
        %1642 = vmatprep.subr.bf16.mxu0 0
        %1643 = vmatpush1.bf16.msra.mxu0 0
        %1644 = vmatprep.subr.bf16.mxu0 0
        %1645 = vmatpush1.bf16.msra.mxu0 0
        %1646 = vmatprep.subr.bf16.mxu0 0
        %1647 = vmatpush1.bf16.msra.mxu0 0
        %1648 = vmatprep.mubr.bf16.mxu0 0
        %1649 = vmatmul.mubr.bf16.gmra.mrb[0].mxu0 %v1558
        %v1650 = vpop.f32.mrb[0].mxu0
        %v1651 = vadd.f32 %v1529, %v1650
        %v1652 = vpop.f32.mrb[0].mxu0
        %v1653 = vadd.f32 %v1529, %v1652
        %v1654 = vpop.f32.mrb[0].mxu0
        %v1655 = vadd.f32 %v1534, %v1654
        %v1656 = vpop.f32.mrb[0].mxu0
        %v1657 = vadd.f32 %v1534, %v1656
        %1658 = vmatprep.mubr.bf16.mxu0 0
        %1659 = vmatmul.mubr.bf16.gmra.mrb[0].mxu0 %v1561
        %v1660 = vpop.f32.mrb[0].mxu0
        %v1661 = vadd.f32 %v1539, %v1660
        %v1662 = vpop.f32.mrb[0].mxu0
        %v1663 = vadd.f32 %v1539, %v1662
        %v1664 = vpop.f32.mrb[0].mxu0
        %v1665 = vadd.f32 %v1544, %v1664
        %v1666 = vpop.f32.mrb[0].mxu0
        %v1667 = vadd.f32 %v1544, %v1666
        %1668 = vdwg.mxu0
        %1669 = vmatprep.subr.bf16.mxu0 %v1491
        %1670 = vmatpush1.bf16.msra.mxu0 %v1490
        %1671 = vmatprep.subr.bf16.mxu0 %v1499
        %1672 = vmatpush1.bf16.msra.mxu0 %v1498
        %1673 = vmatprep.subr.bf16.mxu0 %v1507
        %1674 = vmatpush1.bf16.msra.mxu0 %v1506
        %1675 = vmatprep.subr.bf16.mxu0 %v1515
        %1676 = vmatpush1.bf16.msra.mxu0 %v1514
        %1677 = vmatprep.subr.bf16.mxu0 0
        %1678 = vmatpush1.bf16.msra.mxu0 0
        %1679 = vmatprep.subr.bf16.mxu0 0
        %1680 = vmatpush1.bf16.msra.mxu0 0
        %1681 = vmatprep.subr.bf16.mxu0 0
        %1682 = vmatpush1.bf16.msra.mxu0 0
        %1683 = vmatprep.subr.bf16.mxu0 0
        %1684 = vmatpush1.bf16.msra.mxu0 0
        %1685 = vmatprep.subr.bf16.mxu0 0
        %1686 = vmatpush1.bf16.msra.mxu0 0
        %1687 = vmatprep.subr.bf16.mxu0 0
        %1688 = vmatpush1.bf16.msra.mxu0 0
        %1689 = vmatprep.subr.bf16.mxu0 0
        %1690 = vmatpush1.bf16.msra.mxu0 0
        %1691 = vmatprep.subr.bf16.mxu0 0
        %1692 = vmatpush1.bf16.msra.mxu0 0
        %1693 = vmatprep.subr.bf16.mxu0 0
        %1694 = vmatpush1.bf16.msra.mxu0 0
        %1695 = vmatprep.subr.bf16.mxu0 0
        %1696 = vmatpush1.bf16.msra.mxu0 0
        %1697 = vmatprep.subr.bf16.mxu0 0
        %1698 = vmatpush1.bf16.msra.mxu0 0
        %1699 = vmatprep.subr.bf16.mxu0 0
        %1700 = vmatpush1.bf16.msra.mxu0 0
        %1701 = vmatprep.mubr.bf16.mxu0 0
        %1702 = vmatmul.mubr.bf16.gmra.mrb[0].mxu0 %v1558
        %v1703 = vpop.f32.mrb[0].mxu0
        %v1704 = vadd.f32 %v1529, %v1703
        %v1705 = vpop.f32.mrb[0].mxu0
        %v1706 = vadd.f32 %v1529, %v1705
        %v1707 = vpop.f32.mrb[0].mxu0
        %v1708 = vadd.f32 %v1534, %v1707
        %v1709 = vpop.f32.mrb[0].mxu0
        %v1710 = vadd.f32 %v1534, %v1709
        %1711 = vmatprep.mubr.bf16.mxu0 0
        %1712 = vmatmul.mubr.bf16.gmra.mrb[0].mxu0 %v1561
        %v1713 = vpop.f32.mrb[0].mxu0
        %v1714 = vadd.f32 %v1539, %v1713
        %v1715 = vpop.f32.mrb[0].mxu0
        %v1716 = vadd.f32 %v1539, %v1715
        %v1717 = vpop.f32.mrb[0].mxu0
        %v1718 = vadd.f32 %v1544, %v1717
        %v1719 = vpop.f32.mrb[0].mxu0
        %v1720 = vadd.f32 %v1544, %v1719
        %1721 = vdwg.mxu0
        %1722 = vmatprep.subr.bf16.mxu0 %v1493
        %1723 = vmatpush1.bf16.msra.mxu0 %v1492
        %1724 = vmatprep.subr.bf16.mxu0 %v1501
        %1725 = vmatpush1.bf16.msra.mxu0 %v1500
        %1726 = vmatprep.subr.bf16.mxu0 %v1509
        %1727 = vmatpush1.bf16.msra.mxu0 %v1508
        %1728 = vmatprep.subr.bf16.mxu0 %v1517
        %1729 = vmatpush1.bf16.msra.mxu0 %v1516
        %1730 = vmatprep.subr.bf16.mxu0 0
        %1731 = vmatpush1.bf16.msra.mxu0 0
        %1732 = vmatprep.subr.bf16.mxu0 0
        %1733 = vmatpush1.bf16.msra.mxu0 0
        %1734 = vmatprep.subr.bf16.mxu0 0
        %1735 = vmatpush1.bf16.msra.mxu0 0
        %1736 = vmatprep.subr.bf16.mxu0 0
        %1737 = vmatpush1.bf16.msra.mxu0 0
        %1738 = vmatprep.subr.bf16.mxu0 0
        %1739 = vmatpush1.bf16.msra.mxu0 0
        %1740 = vmatprep.subr.bf16.mxu0 0
        %1741 = vmatpush1.bf16.msra.mxu0 0
        %1742 = vmatprep.subr.bf16.mxu0 0
        %1743 = vmatpush1.bf16.msra.mxu0 0
        %1744 = vmatprep.subr.bf16.mxu0 0
        %1745 = vmatpush1.bf16.msra.mxu0 0
        %1746 = vmatprep.subr.bf16.mxu0 0
        %1747 = vmatpush1.bf16.msra.mxu0 0
        %1748 = vmatprep.subr.bf16.mxu0 0
        %1749 = vmatpush1.bf16.msra.mxu0 0
        %1750 = vmatprep.subr.bf16.mxu0 0
        %1751 = vmatpush1.bf16.msra.mxu0 0
        %1752 = vmatprep.subr.bf16.mxu0 0
        %1753 = vmatpush1.bf16.msra.mxu0 0
        %1754 = vmatprep.mubr.bf16.mxu0 0
        %1755 = vmatmul.mubr.bf16.gmra.mrb[0].mxu0 %v1558
        %v1756 = vpop.f32.mrb[0].mxu0
        %v1757 = vadd.f32 %v1529, %v1756
        %v1758 = vpop.f32.mrb[0].mxu0
        %v1759 = vadd.f32 %v1529, %v1758
        %v1760 = vpop.f32.mrb[0].mxu0
        %v1761 = vadd.f32 %v1534, %v1760
        %v1762 = vpop.f32.mrb[0].mxu0
        %v1763 = vadd.f32 %v1534, %v1762
        %1764 = vmatprep.mubr.bf16.mxu0 0
        %1765 = vmatmul.mubr.bf16.gmra.mrb[0].mxu0 %v1561
        %v1766 = vpop.f32.mrb[0].mxu0
        %v1767 = vadd.f32 %v1539, %v1766
        %v1768 = vpop.f32.mrb[0].mxu0
        %v1769 = vadd.f32 %v1539, %v1768
        %v1770 = vpop.f32.mrb[0].mxu0
        %v1771 = vadd.f32 %v1544, %v1770
        %v1772 = vpop.f32.mrb[0].mxu0
        %v1773 = vadd.f32 %v1544, %v1772
        %1774 = vdwg.mxu0
        %v1775 = vmax.f32 %v1598, 0.0
        %v1776 = vmax.f32 %v1600, 0.0
        %v1777 = vmax.f32 %v1651, 0.0
        %v1778 = vmax.f32 %v1653, 0.0
        %v1779 = vmax.f32 %v1704, 0.0
        %v1780 = vmax.f32 %v1706, 0.0
        %v1781 = vmax.f32 %v1757, 0.0
        %v1782 = vmax.f32 %v1759, 0.0
        %v1783 = vmax.f32 %v1602, 0.0
        %v1784 = vmax.f32 %v1604, 0.0
        %v1785 = vmax.f32 %v1655, 0.0
        %v1786 = vmax.f32 %v1657, 0.0
        %v1787 = vmax.f32 %v1708, 0.0
        %v1788 = vmax.f32 %v1710, 0.0
        %v1789 = vmax.f32 %v1761, 0.0
        %v1790 = vmax.f32 %v1763, 0.0
        %v1791 = vmax.f32 %v1608, 0.0
        %v1792 = vmax.f32 %v1610, 0.0
        %v1793 = vmax.f32 %v1661, 0.0
        %v1794 = vmax.f32 %v1663, 0.0
        %v1795 = vmax.f32 %v1714, 0.0
        %v1796 = vmax.f32 %v1716, 0.0
        %v1797 = vmax.f32 %v1767, 0.0
        %v1798 = vmax.f32 %v1769, 0.0
        %v1799 = vmax.f32 %v1612, 0.0
        %v1800 = vmax.f32 %v1614, 0.0
        %v1801 = vmax.f32 %v1665, 0.0
        %v1802 = vmax.f32 %v1667, 0.0
        %v1803 = vmax.f32 %v1718, 0.0
        %v1804 = vmax.f32 %v1720, 0.0
        %v1805 = vmax.f32 %v1771, 0.0
        %v1806 = vmax.f32 %v1773, 0.0
        %v1807 = vld [vmem:[%s8] sm:$0xff]
        %v1808 = vld [vmem:[%s8 + $0x8] sm:$0xff]
        %v1809 = vld [vmem:[%s8 + $0x10] sm:$0xff]
        %v1810 = vld [vmem:[%s8 + $0x18] sm:$0xff]
        %1812 = vset.pattern.permute.xlu0 0
        %1813 = vperm.xlu0 %1812, %v1807
        %v1814 = vpop.permute.xlu0 %1813
        %1817 = vset.pattern.permute.xlu0 0
        %1818 = vperm.xlu0 %1817, %v1808
        %v1819 = vpop.permute.xlu0 %1818
        %1822 = vset.pattern.permute.xlu0 0
        %1823 = vperm.xlu0 %1822, %v1809
        %v1824 = vpop.permute.xlu0 %1823
        %1827 = vset.pattern.permute.xlu0 0
        %1828 = vperm.xlu0 %1827, %v1810
        %v1829 = vpop.permute.xlu0 %1828
        %v1831 = vmul.f32 %v1814, %v1775
        %v1832 = vmul.f32 %v1814, %v1776
        %v1833 = vmul.f32 %v1814, %v1777
        %v1834 = vmul.f32 %v1814, %v1778
        %v1835 = vmul.f32 %v1814, %v1779
        %v1836 = vmul.f32 %v1814, %v1780
        %v1837 = vmul.f32 %v1814, %v1781
        %v1838 = vmul.f32 %v1814, %v1782
        %v1839 = vmul.f32 %v1819, %v1783
        %v1840 = vmul.f32 %v1819, %v1784
        %v1841 = vmul.f32 %v1819, %v1785
        %v1842 = vmul.f32 %v1819, %v1786
        %v1843 = vmul.f32 %v1819, %v1787
        %v1844 = vmul.f32 %v1819, %v1788
        %v1845 = vmul.f32 %v1819, %v1789
        %v1846 = vmul.f32 %v1819, %v1790
        %v1847 = vmul.f32 %v1824, %v1791
        %v1848 = vmul.f32 %v1824, %v1792
        %v1849 = vmul.f32 %v1824, %v1793
        %v1850 = vmul.f32 %v1824, %v1794
        %v1851 = vmul.f32 %v1824, %v1795
        %v1852 = vmul.f32 %v1824, %v1796
        %v1853 = vmul.f32 %v1824, %v1797
        %v1854 = vmul.f32 %v1824, %v1798
        %v1855 = vmul.f32 %v1829, %v1799
        %v1856 = vmul.f32 %v1829, %v1800
        %v1857 = vmul.f32 %v1829, %v1801
        %v1858 = vmul.f32 %v1829, %v1802
        %v1859 = vmul.f32 %v1829, %v1803
        %v1860 = vmul.f32 %v1829, %v1804
        %v1861 = vmul.f32 %v1829, %v1805
        %v1862 = vmul.f32 %v1829, %v1806
        %v1863 = vadd.f32 %v1831, %v1839
        %v1864 = vadd.f32 %v1863, %v1847
        %v1865 = vadd.f32 %v1864, %v1855
        %v1866 = vrot.slane %v1865, 4
        %v1867 = vadd.f32 %v1865, %v1866
        %v1868 = vrot.slane %v1867, 2
        %v1869 = vadd.f32 %v1867, %v1868
        %v1870 = vrot.slane %v1869, 1
        %v1871 = vadd.f32 %v1869, %v1870
        %v1872 = vadd.f32 %v1832, %v1840
        %v1873 = vadd.f32 %v1872, %v1848
        %v1874 = vadd.f32 %v1873, %v1856
        %v1875 = vrot.slane %v1874, 4
        %v1876 = vadd.f32 %v1874, %v1875
        %v1877 = vrot.slane %v1876, 2
        %v1878 = vadd.f32 %v1876, %v1877
        %v1879 = vrot.slane %v1878, 1
        %v1880 = vadd.f32 %v1878, %v1879
        %v1881 = vadd.f32 %v1833, %v1841
        %v1882 = vadd.f32 %v1881, %v1849
        %v1883 = vadd.f32 %v1882, %v1857
        %v1884 = vrot.slane %v1883, 4
        %v1885 = vadd.f32 %v1883, %v1884
        %v1886 = vrot.slane %v1885, 2
        %v1887 = vadd.f32 %v1885, %v1886
        %v1888 = vrot.slane %v1887, 1
        %v1889 = vadd.f32 %v1887, %v1888
        %v1890 = vadd.f32 %v1834, %v1842
        %v1891 = vadd.f32 %v1890, %v1850
        %v1892 = vadd.f32 %v1891, %v1858
        %v1893 = vrot.slane %v1892, 4
        %v1894 = vadd.f32 %v1892, %v1893
        %v1895 = vrot.slane %v1894, 2
        %v1896 = vadd.f32 %v1894, %v1895
        %v1897 = vrot.slane %v1896, 1
        %v1898 = vadd.f32 %v1896, %v1897
        %v1899 = vadd.f32 %v1835, %v1843
        %v1900 = vadd.f32 %v1899, %v1851
        %v1901 = vadd.f32 %v1900, %v1859
        %v1902 = vrot.slane %v1901, 4
        %v1903 = vadd.f32 %v1901, %v1902
        %v1904 = vrot.slane %v1903, 2
        %v1905 = vadd.f32 %v1903, %v1904
        %v1906 = vrot.slane %v1905, 1
        %v1907 = vadd.f32 %v1905, %v1906
        %v1908 = vadd.f32 %v1836, %v1844
        %v1909 = vadd.f32 %v1908, %v1852
        %v1910 = vadd.f32 %v1909, %v1860
        %v1911 = vrot.slane %v1910, 4
        %v1912 = vadd.f32 %v1910, %v1911
        %v1913 = vrot.slane %v1912, 2
        %v1914 = vadd.f32 %v1912, %v1913
        %v1915 = vrot.slane %v1914, 1
        %v1916 = vadd.f32 %v1914, %v1915
        %v1917 = vadd.f32 %v1837, %v1845
        %v1918 = vadd.f32 %v1917, %v1853
        %v1919 = vadd.f32 %v1918, %v1861
        %v1920 = vrot.slane %v1919, 4
        %v1921 = vadd.f32 %v1919, %v1920
        %v1922 = vrot.slane %v1921, 2
        %v1923 = vadd.f32 %v1921, %v1922
        %v1924 = vrot.slane %v1923, 1
        %v1925 = vadd.f32 %v1923, %v1924
        %v1926 = vadd.f32 %v1838, %v1846
        %v1927 = vadd.f32 %v1926, %v1854
        %v1928 = vadd.f32 %v1927, %v1862
        %v1929 = vrot.slane %v1928, 4
        %v1930 = vadd.f32 %v1928, %v1929
        %v1931 = vrot.slane %v1930, 2
        %v1932 = vadd.f32 %v1930, %v1931
        %v1933 = vrot.slane %v1932, 1
        %v1934 = vadd.f32 %v1932, %v1933
        %v1935 = vld [vmem:[#allocation2] sm:$0x1]
        %1937 = vset.pattern.permute.xlu0 0
        %1938 = vperm.xlu0 %1937, %v1935
        %v1939 = vpop.permute.xlu0 %1938
        %v1941 = vlaneseq
        %v1942 = vshrl.u32 %v1941, 7
        %v1943 = vsub.s32 0, %v1942
        %v1944 = vrot.slane %v1939, %v1943
        %v1945 = vadd.f32 %v1871, %v1944
        %v1946 = vadd.f32 %v1880, %v1944
        %v1947 = vadd.f32 %v1889, %v1944
        %v1948 = vadd.f32 %v1898, %v1944
        %v1949 = vadd.f32 %v1907, %v1944
        %v1950 = vadd.f32 %v1916, %v1944
        %v1951 = vadd.f32 %v1925, %v1944
        %v1952 = vadd.f32 %v1934, %v1944
        %v1953 = vxor.u32 %v1945, 2147483648
        %v1954 = vxor.u32 %v1946, 2147483648
        %v1955 = vxor.u32 %v1947, 2147483648
        %v1956 = vxor.u32 %v1948, 2147483648
        %v1957 = vxor.u32 %v1949, 2147483648
        %v1958 = vxor.u32 %v1950, 2147483648
        %v1959 = vxor.u32 %v1951, 2147483648
        %v1960 = vxor.u32 %v1952, 2147483648
        %v1961 = vmul.f32 %v1953, 1.442695
        %v1962 = vpow.pop %v1961
        %v1963 = vmul.f32 %v1954, 1.442695
        %v1964 = vpow.pop %v1963
        %v1965 = vmul.f32 %v1955, 1.442695
        %v1966 = vpow.pop %v1965
        %v1967 = vmul.f32 %v1956, 1.442695
        %v1968 = vpow.pop %v1967
        %v1969 = vmul.f32 %v1957, 1.442695
        %v1970 = vpow.pop %v1969
        %v1971 = vmul.f32 %v1958, 1.442695
        %v1972 = vpow.pop %v1971
        %v1973 = vmul.f32 %v1959, 1.442695
        %v1974 = vpow.pop %v1973
        %v1975 = vmul.f32 %v1960, 1.442695
        %v1976 = vpow.pop %v1975
        %v1977 = vadd.f32 %v1962, 1.0
        %v1978 = vadd.f32 %v1964, 1.0
        %v1979 = vadd.f32 %v1966, 1.0
        %v1980 = vadd.f32 %v1968, 1.0
        %v1981 = vadd.f32 %v1970, 1.0
        %v1982 = vadd.f32 %v1972, 1.0
        %v1983 = vadd.f32 %v1974, 1.0
        %v1984 = vadd.f32 %v1976, 1.0
        %v1985 = vrcp.pop %v1977
        %v1986 = vmul.f32 1.0, %v1985
        %v1987 = vrcp.pop %v1978
        %v1988 = vmul.f32 1.0, %v1987
        %v1989 = vrcp.pop %v1979
        %v1990 = vmul.f32 1.0, %v1989
        %v1991 = vrcp.pop %v1980
        %v1992 = vmul.f32 1.0, %v1991
        %v1993 = vrcp.pop %v1981
        %v1994 = vmul.f32 1.0, %v1993
        %v1995 = vrcp.pop %v1982
        %v1996 = vmul.f32 1.0, %v1995
        %v1997 = vrcp.pop %v1983
        %v1998 = vmul.f32 1.0, %v1997
        %v1999 = vrcp.pop %v1984
        %v2000 = vmul.f32 1.0, %v1999
        %v2009 = vcombine.low %v1986, %v1988
        %v2010 = vcombine.low %v1990, %v1992
        %v2011 = vcombine.low %v1994, %v1996
        %v2012 = vcombine.low %v1998, %v2000
        %v2014 = vunpack.c.l.s4 1966171168
        %v2015 = vunpack.c.0.s8 %v2014
        %v2016 = vlaneseq
        %v2017 = vshrl.u32 %v2016, 7
        %v2018 = vsub.s32 %v2015, %v2017
        %v2019 = vrot.slane %v2009, %v2018
        %v2021 = vunpack.c.l.s4 1966171168
        %v2022 = vunpack.c.0.s8 %v2021
        %v2023 = vlaneseq
        %v2024 = vshrl.u32 %v2023, 7
        %v2025 = vsub.s32 %v2022, %v2024
        %v2026 = vrot.slane %v2010, %v2025
        %v2028 = vunpack.c.l.s4 1966171168
        %v2029 = vunpack.c.0.s8 %v2028
        %v2030 = vlaneseq
        %v2031 = vshrl.u32 %v2030, 7
        %v2032 = vsub.s32 %v2029, %v2031
        %v2033 = vrot.slane %v2011, %v2032
        %v2035 = vunpack.c.l.s4 1966171168
        %v2036 = vunpack.c.0.s8 %v2035
        %v2037 = vlaneseq
        %v2038 = vshrl.u32 %v2037, 7
        %v2039 = vsub.s32 %v2036, %v2038
        %v2040 = vrot.slane %v2012, %v2039
        %v2041 = vcombine.low %v2019, %v2026
        %v2042 = vcombine.low %v2033, %v2040
        %v2044 = vunpack.c.l.s4 1966171168
        %v2045 = vunpack.c.0.s8 %v2044
        %v2046 = vlaneseq
        %v2047 = vshrl.u32 %v2046, 7
        %v2048 = vsub.s32 %v2045, %v2047
        %v2049 = vrot.slane %v2041, %v2048
        %v2051 = vunpack.c.l.s4 1966171168
        %v2052 = vunpack.c.0.s8 %v2051
        %v2053 = vlaneseq
        %v2054 = vshrl.u32 %v2053, 7
        %v2055 = vsub.s32 %v2052, %v2054
        %v2056 = vrot.slane %v2042, %v2055
        %v2057 = vcombine.low %v2049, %v2056
        %2059 = vst [vmem:[%s392] sm:$0xff] %v2057
        %s2060 = sand.u32 %s273, 1
        %s2061 = scalar_lea.sflag [#allocation5], %s2060
        %s2062 = sand.u32 %s273, 1
        %s2063 = smul.addr %s2062, 8
        %s2064 = scalar_lea.vmem [#allocation6], %s2063
        // Predicated region
        $region65: #{tpu_custom_call.1} parent=59 // pred_check
          %p2065 = pneg %p283
        $region66: #{tpu_custom_call.1} parent=59 // pred_check_branch
          %2067 = sbr.rel (%p2065) target = $region68
        $region67: #{tpu_custom_call.1} parent=59 // pred_region
          %s2068 = sadd.s32 %s33, %s34
          %s2069 = smul.u32 8, %s2068
          %s2071 = ssub.s32 128, 128
          %2072 = vsyncadd %s2061, %s2071
          %s2073 = smul.addr %s32, 256
          %s2074 = sadd.s32 %s2069, %s2073
          %s2075 = smul.addr %s2074, 16
          %s2076 = scalar_lea.hbm %s10, %s2075
          %s2078 = sshll.u32 %s2064, 4
          %s2079 = int_to_ptr.vmem [resolvable:$true] %s2078
          %2081 = dma.vmem_to_hbm [thread:$0]  %s2079, 128, %s2076, %s2061
        $region68: #{tpu_custom_call.1} parent=59 // pred_fallthru
          _
      $region60: #{tpu_custom_call.1} parent=5 // pred_fallthru
        _
      %p2082 = scmp.le.s32.totalorder 2, %s22
      // Predicated region
      $region69: #{tpu_custom_call.1} parent=5 // pred_check
        %p2083 = pneg %p2082
      $region70: #{tpu_custom_call.1} parent=5 // pred_check_branch
        %2085 = sbr.rel (%p2083) target = $region72
      $region71: #{tpu_custom_call.1} parent=5 // pred_region
        %s2086 = ssub.s32 %s22, 2
        // Predicated region
        $region73: #{tpu_custom_call.1} parent=71 // pred_check
          %p2087 = pneg %p289
        $region74: #{tpu_custom_call.1} parent=71 // pred_check_branch
          %2089 = sbr.rel (%p2087) target = $region76
        $region75: #{tpu_custom_call.1} parent=71 // pred_region
          %s2090 = sand.u32 %s274, 1
          %s2091 = scalar_lea.sflag [#allocation5], %s2090
          %s2092 = sand.u32 %s274, 1
          %s2093 = smul.addr %s2092, 8
          %s2094 = scalar_lea.vmem [#allocation6], %s2093
          %2095 = dma.done %s2091, 128
        $region76: #{tpu_custom_call.1} parent=71 // pred_fallthru
          _
      $region72: #{tpu_custom_call.1} parent=5 // pred_fallthru
        _
    $region6: #{tpu_custom_call.1} parent=1 // loop_footer
      %s26 = sadd.s32 1, %s22
    $region7: #{tpu_custom_call.1} parent=1 // loop_footer_branch
      %21 = sbr.rel target = $region3
    $region8: #{tpu_custom_call.1} parent=1 // loop_exit
      _
    %2096 = vsyncpa [#allocation4], 1
    %s2097 = scalar_lea.sflag [#allocation4], 1
    %2098 = vsyncpa %s2097, 1
    %2099 = vsyncpa [#allocation5], 1
    %s2100 = scalar_lea.sflag [#allocation5], 1
    %2101 = vsyncpa %s2100, 1

</llo_original>
